<compile_context>
chip_gen: v5e
topology: v5e:2x2
jax: 0.10.0
libtpu: 0.0.40
codegen_flags: <defaults>
</compile_context>

<pallas_src>
import functools

import jax
import jax.numpy as jnp
from jax import lax
from jax.experimental import pallas as pl
from jax.experimental.pallas import tpu as pltpu

LANE = 128      # TPU lane width (last-dim tile)
SUBLANE = 8     # TPU sublane width (second-to-last-dim tile)


def _round_up(x, m):
    return (x + m - 1) // m * m


def _pick_tile_h(H, W, K, c_max_pad, budget_bytes=4 << 20):
    """Largest divisor of H whose per-tile activation working set fits budget."""
    per_row = W * (K + 2) * c_max_pad * 4      # patches + in + out, f32 bytes
    best = 1
    for th in range(1, H + 1):
        if H % th == 0 and th * per_row <= budget_bytes:
            best = th
    return best


# --------------------------------------------------------------------------
# Fused Pallas kernel: 6 x (conv + folded-BN + ReLU) -> GAP -> FC.
# One grid step per (batch element, row tile).
# --------------------------------------------------------------------------
def _make_fused_kernel(n_layers, K, pad, W, hw_total):
    def kernel(x_ref, *refs):
        # refs = [w_0, b_0, ..., w_{L-1}, b_{L-1}, wfc, bfc, out_ref, pooled_ref]
        layer_refs = refs[:2 * n_layers]
        wfc_ref = refs[2 * n_layers]
        bfc_ref = refs[2 * n_layers + 1]
        out_ref = refs[2 * n_layers + 2]
        pooled_ref = refs[2 * n_layers + 3]

        t = pl.program_id(1)

        a = x_ref[...]                        # (tile_h, W, Cin0_pad) f32
        tile_h = a.shape[0]
        rows = tile_h * W

        for l in range(n_layers):
            w = layer_refs[2 * l][...]        # (K*Cin_pad, Cout_pad), BN folded
            b = layer_refs[2 * l + 1][...]    # (1, Cout_pad), BN folded
            c_in = a.shape[-1]

            # 'same' zero padding along W, entirely as VMEM values (no HBM pad).
            if pad > 0:
                zpad = jnp.zeros((tile_h, pad, c_in), a.dtype)
                ap = jnp.concatenate([zpad, a, zpad], axis=1)
            else:
                ap = a
            # im2col: (tile_h, W, K*Cin_pad) -> one MXU matmul per layer.
            if K > 1:
                patches = jnp.concatenate(
                    [ap[:, k:k + W, :] for k in range(K)], axis=2)
            else:
                patches = ap
            y = jnp.dot(patches.reshape(rows, K * c_in), w,
                        preferred_element_type=jnp.float32)
            a = jnp.maximum(y + b, 0.0).reshape(tile_h, W, w.shape[1])

        # GAP partial sum for this row tile (accumulated in VMEM scratch).
        psum = jnp.sum(a.reshape(rows, a.shape[-1]), axis=0, keepdims=True)

        @pl.when(t == 0)
        def _():
            pooled_ref[...] = jnp.zeros_like(pooled_ref)

        pooled_ref[...] += psum

        # Last row tile of this batch element: finish GAP, run FC, emit logits.
        @pl.when(t == pl.num_programs(1) - 1)
        def _():
            pooled = pooled_ref[...] * (1.0 / float(hw_total))     # (1, C_pad)
            logits = (jnp.dot(pooled, wfc_ref[...],
                              preferred_element_type=jnp.float32)
                      + bfc_ref[...])                              # (1, NC_pad)
            # Output block is (SUBLANE, NC_pad) so the store is lane/sublane
            # dense; row 0 carries the logits (wrapper slices it back out).
            out_ref[...] = jnp.broadcast_to(logits, out_ref.shape)

    return kernel


# --------------------------------------------------------------------------
# Forward wrapper
# --------------------------------------------------------------------------
@functools.partial(jax.jit, static_argnames=("num_classes",))
def convnet2d_forward(x_nchw, kparams, *, num_classes):
    """x_nchw: (N, C, H, W) float32 -> logits (N, num_classes) float32."""
    N, C, H, W = x_nchw.shape
    layers = kparams["layers"]
    n_layers = len(layers)

    cin_p = _round_up(C, LANE)
    K = layers[0][0].shape[0] // cin_p
    pad = (K - 1) // 2
    c_last_p = kparams["wfc"].shape[0]
    nc_p = kparams["wfc"].shape[1]

    # Layout plumbing: NCHW -> lane-dense channel-last (N, H, W, Cin_pad).
    xt = jnp.transpose(x_nchw, (0, 2, 3, 1))
    xt = jnp.pad(xt, ((0, 0), (0, 0), (0, 0), (0, cin_p - C)))

    c_max_p = max([cin_p] + [w.shape[1] for (w, _) in layers])
    tile_h = _pick_tile_h(H, W, K, c_max_p)
    num_t = H // tile_h

    kernel = _make_fused_kernel(n_layers, K, pad, W, H * W)

    in_specs = [pl.BlockSpec((None, tile_h, W, cin_p),
                             lambda n, t: (n, t, 0, 0))]
    operands = [xt]
    for (w_p, b_p) in layers:
        in_specs.append(pl.BlockSpec(w_p.shape, lambda n, t: (0, 0)))
        in_specs.append(pl.BlockSpec(b_p.shape, lambda n, t: (0, 0)))
        operands += [w_p, b_p]
    in_specs.append(pl.BlockSpec(kparams["wfc"].shape, lambda n, t: (0, 0)))
    in_specs.append(pl.BlockSpec(kparams["bfc"].shape, lambda n, t: (0, 0)))
    operands += [kparams["wfc"], kparams["bfc"]]

    out = pl.pallas_call(
        kernel,
        out_shape=jax.ShapeDtypeStruct((N, SUBLANE, nc_p), jnp.float32),
        grid=(N, num_t),
        in_specs=in_specs,
        out_specs=pl.BlockSpec((None, SUBLANE, nc_p), lambda n, t: (n, 0, 0)),
        scratch_shapes=[pltpu.VMEM((1, c_last_p), jnp.float32)],
        compiler_params=pltpu.CompilerParams(
            dimension_semantics=("parallel", "arbitrary")),
    )(*operands)
    return out[:, 0, :num_classes]


# --------------------------------------------------------------------------
# Parameters: raw (PyTorch-like) + packed (padded / BN-folded / im2col-ready)
# --------------------------------------------------------------------------
def init_params(key, nb_channel, nchan, time_kernel, num_classes):
    """Synthetic parameters matching the PyTorch __init__ (6-layer config)."""
    plan = [(nb_channel, nchan), (nchan, nchan), (nchan, 2 * nchan),
            (2 * nchan, 2 * nchan), (2 * nchan, 2 * nchan), (2 * nchan, 2 * nchan)]
    has_bn = [True, True, True, True, True, False]     # layer3 has no BatchNorm
    eps = 1e-5

    convs = []
    for (cin, cout), bn in zip(plan, has_bn):
        key, kw, kb = jax.random.split(key, 3)
        fan_in = cin * time_kernel
        bound = 1.0 / jnp.sqrt(fan_in)
        # PyTorch conv weight is (Cout, Cin, 1, K); stored here as (K, Cin, Cout).
        w = jax.random.uniform(kw, (time_kernel, cin, cout), jnp.float32,
                               -bound, bound)
        b = jax.random.uniform(kb, (1, cout), jnp.float32, -bound, bound)
        if bn:
            # eval-mode BatchNorm2d affine: scale = gamma/sqrt(var+eps),
            # shift = beta - mean*scale (random stats to exercise the fold).
            key, kg, kb2, km, kv = jax.random.split(key, 5)
            gamma = jax.random.uniform(kg, (cout,), jnp.float32, 0.5, 1.5)
            beta = jax.random.uniform(kb2, (cout,), jnp.float32, -0.5, 0.5)
            mean = jax.random.uniform(km, (cout,), jnp.float32, -0.5, 0.5)
            var = jax.random.uniform(kv, (cout,), jnp.float32, 0.5, 1.5)
            scale = (gamma / jnp.sqrt(var + eps)).reshape(1, cout)
            shift = (beta - mean * gamma / jnp.sqrt(var + eps)).reshape(1, cout)
        else:
            scale = jnp.ones((1, cout), jnp.float32)
            shift = jnp.zeros((1, cout), jnp.float32)
        convs.append(dict(w=w, b=b, scale=scale, shift=shift))

    cfinal = plan[-1][1]
    key, kw, kb = jax.random.split(key, 3)
    bound = 1.0 / jnp.sqrt(cfinal)
    wfc = jax.random.uniform(kw, (cfinal, num_classes), jnp.float32, -bound, bound)
    bfc = jax.random.uniform(kb, (1, num_classes), jnp.float32, -bound, bound)
    return dict(convs=convs, wfc=wfc, bfc=bfc)


def pack_params(raw, lane=LANE):
    """Fold BN into conv params, zero-pad channels/classes to lane multiples,
    and reshape conv weights to im2col layout (K*Cin_pad, Cout_pad)."""
    layers = []
    for p in raw["convs"]:
        K, cin, cout = p["w"].shape
        scale = p["scale"].reshape(-1)
        shift = p["shift"].reshape(-1)
        w = p["w"] * scale[None, None, :]                 # fold BN scale
        b = p["b"].reshape(-1) * scale + shift            # fold BN shift
        cin_p = _round_up(cin, lane)
        cout_p = _round_up(cout, lane)
        w_p = jnp.zeros((K, cin_p, cout_p), jnp.float32).at[:, :cin, :cout].set(w)
        w_p = w_p.reshape(K * cin_p, cout_p)
        b_p = jnp.zeros((1, cout_p), jnp.float32).at[:, :cout].set(b[None, :])
        layers.append((w_p, b_p))

    cfin, nc = raw["wfc"].shape
    cfin_p = _round_up(cfin, lane)
    nc_p = _round_up(nc, lane)
    wfc_p = jnp.zeros((cfin_p, nc_p), jnp.float32).at[:cfin, :nc].set(raw["wfc"])
    bfc_p = jnp.zeros((1, nc_p), jnp.float32).at[:, :nc].set(raw["bfc"])
    return dict(layers=layers, wfc=wfc_p, bfc=bfc_p)


# --------------------------------------------------------------------------
# Pure-JAX/XLA reference with PyTorch-equivalent semantics (NCHW convs).
# --------------------------------------------------------------------------
def reference_forward(x_nchw, params):
    h = x_nchw
    for p in params["convs"]:
        w_oihw = jnp.transpose(p["w"], (2, 1, 0))[:, :, None, :]   # (Cout,Cin,1,K)
        h = lax.conv_general_dilated(
            h, w_oihw, window_strides=(1, 1), padding="SAME",
            dimension_numbers=("NCHW", "OIHW", "NCHW"))
        h = h + p["b"].reshape(1, -1, 1, 1)
        h = h * p["scale"].reshape(1, -1, 1, 1) + p["shift"].reshape(1, -1, 1, 1)
        h = jnp.maximum(h, 0.0)
    pooled = jnp.mean(h, axis=(2, 3))                               # GAP
    return pooled @ params["wfc"] + params["bfc"]


# --------------------------------------------------------------------------
if __name__ == "__main__":
    # Small, forward-consistent shapes (stand-ins for the real config):
    N = 2                    # batch
    nb_channel = 4           # input channels (NCHW "C")
    original_dim = 3         # H
    original_length = 16     # W (time axis, convolved with kernel (1,3))
    nchan = 32               # TRIAL_number_of_channels (small stand-in for 128)
    time_kernel = 3          # TRIAL_time_kernel
    num_classes = 10

    key = jax.random.PRNGKey(0)
    key, kx = jax.random.split(key)
    x = jax.random.normal(
        kx, (N, nb_channel, original_dim, original_length), jnp.float32)

    raw_params = init_params(key, nb_channel, nchan, time_kernel, num_classes)
    kparams = pack_params(raw_params)

    out = convnet2d_forward(x, kparams, num_classes=num_classes)
    out = jax.block_until_ready(out)

    ref = jax.block_until_ready(reference_forward(x, raw_params))
    assert out.shape == (N, num_classes), out.shape
    assert jnp.allclose(out, ref, rtol=1e-4, atol=1e-4), (
        "mismatch vs reference: max abs diff "
        f"{float(jnp.max(jnp.abs(out - ref)))}")

    print("KERNEL_OK")
</pallas_src>

<mosaic_0001>
module attributes {stable_mosaic.version = 11 : i64} {
  func.func @kernel(%arg0: i32, %arg1: i32, %arg2: memref<1x3x16x128xf32, #tpu.memory_space<vmem>>, %arg3: memref<384x128xf32, #tpu.memory_space<vmem>>, %arg4: memref<1x128xf32, #tpu.memory_space<vmem>>, %arg5: memref<384x128xf32, #tpu.memory_space<vmem>>, %arg6: memref<1x128xf32, #tpu.memory_space<vmem>>, %arg7: memref<384x128xf32, #tpu.memory_space<vmem>>, %arg8: memref<1x128xf32, #tpu.memory_space<vmem>>, %arg9: memref<384x128xf32, #tpu.memory_space<vmem>>, %arg10: memref<1x128xf32, #tpu.memory_space<vmem>>, %arg11: memref<384x128xf32, #tpu.memory_space<vmem>>, %arg12: memref<1x128xf32, #tpu.memory_space<vmem>>, %arg13: memref<384x128xf32, #tpu.memory_space<vmem>>, %arg14: memref<1x128xf32, #tpu.memory_space<vmem>>, %arg15: memref<128x128xf32, #tpu.memory_space<vmem>>, %arg16: memref<1x128xf32, #tpu.memory_space<vmem>>, %arg17: memref<1x8x128xf32, #tpu.memory_space<vmem>>, %arg18: memref<1x128xf32, #tpu.memory_space<vmem>>) attributes {dimension_semantics = [#tpu.dimension_semantics<parallel>, #tpu.dimension_semantics<arbitrary>], iteration_bounds = array<i64: 2, 1>, scalar_prefetch = 0 : i64, scratch_operands = 1 : i64, tpu.core_type = #tpu.core_type<tc>, window_params = [{transform_indices = @transform_0, window_bounds = array<i64: 1, 3, 16, 128>}, {pipeline_mode = #tpu.pipeline_mode<synchronous>, transform_indices = @transform_1, window_bounds = array<i64: 384, 128>}, {pipeline_mode = #tpu.pipeline_mode<synchronous>, transform_indices = @transform_2, window_bounds = array<i64: 1, 128>}, {pipeline_mode = #tpu.pipeline_mode<synchronous>, transform_indices = @transform_3, window_bounds = array<i64: 384, 128>}, {pipeline_mode = #tpu.pipeline_mode<synchronous>, transform_indices = @transform_4, window_bounds = array<i64: 1, 128>}, {pipeline_mode = #tpu.pipeline_mode<synchronous>, transform_indices = @transform_5, window_bounds = array<i64: 384, 128>}, {pipeline_mode = #tpu.pipeline_mode<synchronous>, transform_indices = @transform_6, window_bounds = array<i64: 1, 128>}, {pipeline_mode = #tpu.pipeline_mode<synchronous>, transform_indices = @transform_7, window_bounds = array<i64: 384, 128>}, {pipeline_mode = #tpu.pipeline_mode<synchronous>, transform_indices = @transform_8, window_bounds = array<i64: 1, 128>}, {pipeline_mode = #tpu.pipeline_mode<synchronous>, transform_indices = @transform_9, window_bounds = array<i64: 384, 128>}, {pipeline_mode = #tpu.pipeline_mode<synchronous>, transform_indices = @transform_10, window_bounds = array<i64: 1, 128>}, {pipeline_mode = #tpu.pipeline_mode<synchronous>, transform_indices = @transform_11, window_bounds = array<i64: 384, 128>}, {pipeline_mode = #tpu.pipeline_mode<synchronous>, transform_indices = @transform_12, window_bounds = array<i64: 1, 128>}, {pipeline_mode = #tpu.pipeline_mode<synchronous>, transform_indices = @transform_13, window_bounds = array<i64: 128, 128>}, {pipeline_mode = #tpu.pipeline_mode<synchronous>, transform_indices = @transform_14, window_bounds = array<i64: 1, 128>}, {transform_indices = @transform_15, window_bounds = array<i64: 1, 8, 128>}]} {
    %c0 = arith.constant 0 : index
    %c0_0 = arith.constant 0 : index
    %c0_1 = arith.constant 0 : index
    %c0_2 = arith.constant 0 : index
    %0 = vector.load %arg2[%c0, %c0_0, %c0_1, %c0_2] : memref<1x3x16x128xf32, #tpu.memory_space<vmem>>, vector<1x3x16x128xf32>
    %1 = vector.shape_cast %0 : vector<1x3x16x128xf32> to vector<3x16x128xf32>
    %c0_3 = arith.constant 0 : index
    %c0_4 = arith.constant 0 : index
    %2 = vector.load %arg3[%c0_3, %c0_4] : memref<384x128xf32, #tpu.memory_space<vmem>>, vector<384x128xf32>
    %c0_5 = arith.constant 0 : index
    %c0_6 = arith.constant 0 : index
    %3 = vector.load %arg4[%c0_5, %c0_6] : memref<1x128xf32, #tpu.memory_space<vmem>>, vector<1x128xf32>
    %cst = arith.constant 0.000000e+00 : f32
    %4 = vector.broadcast %cst : f32 to vector<3x1x128xf32>
    %5 = tpu.concatenate %4, %1, %4 in 1 : vector<3x1x128xf32>, vector<3x16x128xf32>, vector<3x1x128xf32> -> vector<3x18x128xf32>
    %6 = vector.extract_strided_slice %5 {offsets = [0, 0, 0], sizes = [3, 16, 128], strides = [1, 1, 1]} : vector<3x18x128xf32> to vector<3x16x128xf32>
    %7 = vector.extract_strided_slice %5 {offsets = [0, 1, 0], sizes = [3, 16, 128], strides = [1, 1, 1]} : vector<3x18x128xf32> to vector<3x16x128xf32>
    %8 = vector.extract_strided_slice %5 {offsets = [0, 2, 0], sizes = [3, 16, 128], strides = [1, 1, 1]} : vector<3x18x128xf32> to vector<3x16x128xf32>
    %9 = tpu.concatenate %6, %7, %8 in 2 : vector<3x16x128xf32>, vector<3x16x128xf32>, vector<3x16x128xf32> -> vector<3x16x384xf32>
    %10 = vector.shape_cast %9 : vector<3x16x384xf32> to vector<48x384xf32>
    %cst_7 = arith.constant dense<0.000000e+00> : vector<48x128xf32>
    %11 = tpu.matmul %10, %2, %cst_7 {dimension_numbers = #tpu.dot_dimension_numbers<[1], [0], [0], [1], [0, 0, 1, 1], [], []>} : vector<48x384xf32>, vector<384x128xf32>, vector<48x128xf32> -> vector<48x128xf32>
    %12 = vector.broadcast %3 : vector<1x128xf32> to vector<48x128xf32>
    %13 = arith.addf %11, %12 : vector<48x128xf32>
    %cst_8 = arith.constant 0.000000e+00 : f32
    %14 = vector.broadcast %cst_8 : f32 to vector<48x128xf32>
    %15 = arith.maximumf %13, %14 : vector<48x128xf32>
    %16 = vector.shape_cast %15 : vector<48x128xf32> to vector<3x16x128xf32>
    %c0_9 = arith.constant 0 : index
    %c0_10 = arith.constant 0 : index
    %17 = vector.load %arg5[%c0_9, %c0_10] : memref<384x128xf32, #tpu.memory_space<vmem>>, vector<384x128xf32>
    %c0_11 = arith.constant 0 : index
    %c0_12 = arith.constant 0 : index
    %18 = vector.load %arg6[%c0_11, %c0_12] : memref<1x128xf32, #tpu.memory_space<vmem>>, vector<1x128xf32>
    %cst_13 = arith.constant 0.000000e+00 : f32
    %19 = vector.broadcast %cst_13 : f32 to vector<3x1x128xf32>
    %20 = tpu.concatenate %19, %16, %19 in 1 : vector<3x1x128xf32>, vector<3x16x128xf32>, vector<3x1x128xf32> -> vector<3x18x128xf32>
    %21 = vector.extract_strided_slice %20 {offsets = [0, 0, 0], sizes = [3, 16, 128], strides = [1, 1, 1]} : vector<3x18x128xf32> to vector<3x16x128xf32>
    %22 = vector.extract_strided_slice %20 {offsets = [0, 1, 0], sizes = [3, 16, 128], strides = [1, 1, 1]} : vector<3x18x128xf32> to vector<3x16x128xf32>
    %23 = vector.extract_strided_slice %20 {offsets = [0, 2, 0], sizes = [3, 16, 128], strides = [1, 1, 1]} : vector<3x18x128xf32> to vector<3x16x128xf32>
    %24 = tpu.concatenate %21, %22, %23 in 2 : vector<3x16x128xf32>, vector<3x16x128xf32>, vector<3x16x128xf32> -> vector<3x16x384xf32>
    %25 = vector.shape_cast %24 : vector<3x16x384xf32> to vector<48x384xf32>
    %cst_14 = arith.constant dense<0.000000e+00> : vector<48x128xf32>
    %26 = tpu.matmul %25, %17, %cst_14 {dimension_numbers = #tpu.dot_dimension_numbers<[1], [0], [0], [1], [0, 0, 1, 1], [], []>} : vector<48x384xf32>, vector<384x128xf32>, vector<48x128xf32> -> vector<48x128xf32>
    %27 = vector.broadcast %18 : vector<1x128xf32> to vector<48x128xf32>
    %28 = arith.addf %26, %27 : vector<48x128xf32>
    %cst_15 = arith.constant 0.000000e+00 : f32
    %29 = vector.broadcast %cst_15 : f32 to vector<48x128xf32>
    %30 = arith.maximumf %28, %29 : vector<48x128xf32>
    %31 = vector.shape_cast %30 : vector<48x128xf32> to vector<3x16x128xf32>
    %c0_16 = arith.constant 0 : index
    %c0_17 = arith.constant 0 : index
    %32 = vector.load %arg7[%c0_16, %c0_17] : memref<384x128xf32, #tpu.memory_space<vmem>>, vector<384x128xf32>
    %c0_18 = arith.constant 0 : index
    %c0_19 = arith.constant 0 : index
    %33 = vector.load %arg8[%c0_18, %c0_19] : memref<1x128xf32, #tpu.memory_space<vmem>>, vector<1x128xf32>
    %cst_20 = arith.constant 0.000000e+00 : f32
    %34 = vector.broadcast %cst_20 : f32 to vector<3x1x128xf32>
    %35 = tpu.concatenate %34, %31, %34 in 1 : vector<3x1x128xf32>, vector<3x16x128xf32>, vector<3x1x128xf32> -> vector<3x18x128xf32>
    %36 = vector.extract_strided_slice %35 {offsets = [0, 0, 0], sizes = [3, 16, 128], strides = [1, 1, 1]} : vector<3x18x128xf32> to vector<3x16x128xf32>
    %37 = vector.extract_strided_slice %35 {offsets = [0, 1, 0], sizes = [3, 16, 128], strides = [1, 1, 1]} : vector<3x18x128xf32> to vector<3x16x128xf32>
    %38 = vector.extract_strided_slice %35 {offsets = [0, 2, 0], sizes = [3, 16, 128], strides = [1, 1, 1]} : vector<3x18x128xf32> to vector<3x16x128xf32>
    %39 = tpu.concatenate %36, %37, %38 in 2 : vector<3x16x128xf32>, vector<3x16x128xf32>, vector<3x16x128xf32> -> vector<3x16x384xf32>
    %40 = vector.shape_cast %39 : vector<3x16x384xf32> to vector<48x384xf32>
    %cst_21 = arith.constant dense<0.000000e+00> : vector<48x128xf32>
    %41 = tpu.matmul %40, %32, %cst_21 {dimension_numbers = #tpu.dot_dimension_numbers<[1], [0], [0], [1], [0, 0, 1, 1], [], []>} : vector<48x384xf32>, vector<384x128xf32>, vector<48x128xf32> -> vector<48x128xf32>
    %42 = vector.broadcast %33 : vector<1x128xf32> to vector<48x128xf32>
    %43 = arith.addf %41, %42 : vector<48x128xf32>
    %cst_22 = arith.constant 0.000000e+00 : f32
    %44 = vector.broadcast %cst_22 : f32 to vector<48x128xf32>
    %45 = arith.maximumf %43, %44 : vector<48x128xf32>
    %46 = vector.shape_cast %45 : vector<48x128xf32> to vector<3x16x128xf32>
    %c0_23 = arith.constant 0 : index
    %c0_24 = arith.constant 0 : index
    %47 = vector.load %arg9[%c0_23, %c0_24] : memref<384x128xf32, #tpu.memory_space<vmem>>, vector<384x128xf32>
    %c0_25 = arith.constant 0 : index
    %c0_26 = arith.constant 0 : index
    %48 = vector.load %arg10[%c0_25, %c0_26] : memref<1x128xf32, #tpu.memory_space<vmem>>, vector<1x128xf32>
    %cst_27 = arith.constant 0.000000e+00 : f32
    %49 = vector.broadcast %cst_27 : f32 to vector<3x1x128xf32>
    %50 = tpu.concatenate %49, %46, %49 in 1 : vector<3x1x128xf32>, vector<3x16x128xf32>, vector<3x1x128xf32> -> vector<3x18x128xf32>
    %51 = vector.extract_strided_slice %50 {offsets = [0, 0, 0], sizes = [3, 16, 128], strides = [1, 1, 1]} : vector<3x18x128xf32> to vector<3x16x128xf32>
    %52 = vector.extract_strided_slice %50 {offsets = [0, 1, 0], sizes = [3, 16, 128], strides = [1, 1, 1]} : vector<3x18x128xf32> to vector<3x16x128xf32>
    %53 = vector.extract_strided_slice %50 {offsets = [0, 2, 0], sizes = [3, 16, 128], strides = [1, 1, 1]} : vector<3x18x128xf32> to vector<3x16x128xf32>
    %54 = tpu.concatenate %51, %52, %53 in 2 : vector<3x16x128xf32>, vector<3x16x128xf32>, vector<3x16x128xf32> -> vector<3x16x384xf32>
    %55 = vector.shape_cast %54 : vector<3x16x384xf32> to vector<48x384xf32>
    %cst_28 = arith.constant dense<0.000000e+00> : vector<48x128xf32>
    %56 = tpu.matmul %55, %47, %cst_28 {dimension_numbers = #tpu.dot_dimension_numbers<[1], [0], [0], [1], [0, 0, 1, 1], [], []>} : vector<48x384xf32>, vector<384x128xf32>, vector<48x128xf32> -> vector<48x128xf32>
    %57 = vector.broadcast %48 : vector<1x128xf32> to vector<48x128xf32>
    %58 = arith.addf %56, %57 : vector<48x128xf32>
    %cst_29 = arith.constant 0.000000e+00 : f32
    %59 = vector.broadcast %cst_29 : f32 to vector<48x128xf32>
    %60 = arith.maximumf %58, %59 : vector<48x128xf32>
    %61 = vector.shape_cast %60 : vector<48x128xf32> to vector<3x16x128xf32>
    %c0_30 = arith.constant 0 : index
    %c0_31 = arith.constant 0 : index
    %62 = vector.load %arg11[%c0_30, %c0_31] : memref<384x128xf32, #tpu.memory_space<vmem>>, vector<384x128xf32>
    %c0_32 = arith.constant 0 : index
    %c0_33 = arith.constant 0 : index
    %63 = vector.load %arg12[%c0_32, %c0_33] : memref<1x128xf32, #tpu.memory_space<vmem>>, vector<1x128xf32>
    %cst_34 = arith.constant 0.000000e+00 : f32
    %64 = vector.broadcast %cst_34 : f32 to vector<3x1x128xf32>
    %65 = tpu.concatenate %64, %61, %64 in 1 : vector<3x1x128xf32>, vector<3x16x128xf32>, vector<3x1x128xf32> -> vector<3x18x128xf32>
    %66 = vector.extract_strided_slice %65 {offsets = [0, 0, 0], sizes = [3, 16, 128], strides = [1, 1, 1]} : vector<3x18x128xf32> to vector<3x16x128xf32>
    %67 = vector.extract_strided_slice %65 {offsets = [0, 1, 0], sizes = [3, 16, 128], strides = [1, 1, 1]} : vector<3x18x128xf32> to vector<3x16x128xf32>
    %68 = vector.extract_strided_slice %65 {offsets = [0, 2, 0], sizes = [3, 16, 128], strides = [1, 1, 1]} : vector<3x18x128xf32> to vector<3x16x128xf32>
    %69 = tpu.concatenate %66, %67, %68 in 2 : vector<3x16x128xf32>, vector<3x16x128xf32>, vector<3x16x128xf32> -> vector<3x16x384xf32>
    %70 = vector.shape_cast %69 : vector<3x16x384xf32> to vector<48x384xf32>
    %cst_35 = arith.constant dense<0.000000e+00> : vector<48x128xf32>
    %71 = tpu.matmul %70, %62, %cst_35 {dimension_numbers = #tpu.dot_dimension_numbers<[1], [0], [0], [1], [0, 0, 1, 1], [], []>} : vector<48x384xf32>, vector<384x128xf32>, vector<48x128xf32> -> vector<48x128xf32>
    %72 = vector.broadcast %63 : vector<1x128xf32> to vector<48x128xf32>
    %73 = arith.addf %71, %72 : vector<48x128xf32>
    %cst_36 = arith.constant 0.000000e+00 : f32
    %74 = vector.broadcast %cst_36 : f32 to vector<48x128xf32>
    %75 = arith.maximumf %73, %74 : vector<48x128xf32>
    %76 = vector.shape_cast %75 : vector<48x128xf32> to vector<3x16x128xf32>
    %c0_37 = arith.constant 0 : index
    %c0_38 = arith.constant 0 : index
    %77 = vector.load %arg13[%c0_37, %c0_38] : memref<384x128xf32, #tpu.memory_space<vmem>>, vector<384x128xf32>
    %c0_39 = arith.constant 0 : index
    %c0_40 = arith.constant 0 : index
    %78 = vector.load %arg14[%c0_39, %c0_40] : memref<1x128xf32, #tpu.memory_space<vmem>>, vector<1x128xf32>
    %cst_41 = arith.constant 0.000000e+00 : f32
    %79 = vector.broadcast %cst_41 : f32 to vector<3x1x128xf32>
    %80 = tpu.concatenate %79, %76, %79 in 1 : vector<3x1x128xf32>, vector<3x16x128xf32>, vector<3x1x128xf32> -> vector<3x18x128xf32>
    %81 = vector.extract_strided_slice %80 {offsets = [0, 0, 0], sizes = [3, 16, 128], strides = [1, 1, 1]} : vector<3x18x128xf32> to vector<3x16x128xf32>
    %82 = vector.extract_strided_slice %80 {offsets = [0, 1, 0], sizes = [3, 16, 128], strides = [1, 1, 1]} : vector<3x18x128xf32> to vector<3x16x128xf32>
    %83 = vector.extract_strided_slice %80 {offsets = [0, 2, 0], sizes = [3, 16, 128], strides = [1, 1, 1]} : vector<3x18x128xf32> to vector<3x16x128xf32>
    %84 = tpu.concatenate %81, %82, %83 in 2 : vector<3x16x128xf32>, vector<3x16x128xf32>, vector<3x16x128xf32> -> vector<3x16x384xf32>
    %85 = vector.shape_cast %84 : vector<3x16x384xf32> to vector<48x384xf32>
    %cst_42 = arith.constant dense<0.000000e+00> : vector<48x128xf32>
    %86 = tpu.matmul %85, %77, %cst_42 {dimension_numbers = #tpu.dot_dimension_numbers<[1], [0], [0], [1], [0, 0, 1, 1], [], []>} : vector<48x384xf32>, vector<384x128xf32>, vector<48x128xf32> -> vector<48x128xf32>
    %87 = vector.broadcast %78 : vector<1x128xf32> to vector<48x128xf32>
    %88 = arith.addf %86, %87 : vector<48x128xf32>
    %cst_43 = arith.constant 0.000000e+00 : f32
    %89 = vector.broadcast %cst_43 : f32 to vector<48x128xf32>
    %90 = arith.maximumf %88, %89 : vector<48x128xf32>
    %91 = vector.shape_cast %90 : vector<48x128xf32> to vector<3x16x128xf32>
    %92 = vector.shape_cast %91 : vector<3x16x128xf32> to vector<48x128xf32>
    %cst_44 = arith.constant dense<0.000000e+00> : vector<128xf32>
    %93 = vector.multi_reduction <add>, %92, %cst_44 [0] : vector<48x128xf32> to vector<128xf32>
    %94 = vector.shape_cast %93 : vector<128xf32> to vector<1x128xf32>
    %c0_i32 = arith.constant 0 : i32
    %95 = arith.cmpi eq, %arg1, %c0_i32 : i32
    %96 = arith.extui %95 : i1 to i32
    %c0_i32_45 = arith.constant 0 : i32
    %97 = arith.cmpi ne, %96, %c0_i32_45 : i32
    scf.if %97 {
      %cst_52 = arith.constant 0.000000e+00 : f32
      %104 = vector.broadcast %cst_52 : f32 to vector<1x128xf32>
      %c0_53 = arith.constant 0 : index
      %c0_54 = arith.constant 0 : index
      %105 = vector.load %arg18[%c0_53, %c0_54] : memref<1x128xf32, #tpu.memory_space<vmem>>, vector<1x128xf32>
      tpu.vector_store %arg18[%c0_53, %c0_54], %104 {strides = array<i32>} : memref<1x128xf32, #tpu.memory_space<vmem>>, vector<1x128xf32>,
    } else {
    }
    %c0_46 = arith.constant 0 : index
    %c0_47 = arith.constant 0 : index
    %98 = vector.load %arg18[%c0_46, %c0_47] : memref<1x128xf32, #tpu.memory_space<vmem>>, vector<1x128xf32>
    %99 = arith.addf %98, %94 : vector<1x128xf32>
    %c0_48 = arith.constant 0 : index
    %c0_49 = arith.constant 0 : index
    %100 = vector.load %arg18[%c0_48, %c0_49] : memref<1x128xf32, #tpu.memory_space<vmem>>, vector<1x128xf32>
    tpu.vector_store %arg18[%c0_48, %c0_49], %99 {strides = array<i32>} : memref<1x128xf32, #tpu.memory_space<vmem>>, vector<1x128xf32>,
    %c0_i32_50 = arith.constant 0 : i32
    %101 = arith.cmpi eq, %arg1, %c0_i32_50 : i32
    %102 = arith.extui %101 : i1 to i32
    %c0_i32_51 = arith.constant 0 : i32
    %103 = arith.cmpi ne, %102, %c0_i32_51 : i32
    scf.if %103 {
      %c0_52 = arith.constant 0 : index
      %c0_53 = arith.constant 0 : index
      %104 = vector.load %arg18[%c0_52, %c0_53] : memref<1x128xf32, #tpu.memory_space<vmem>>, vector<1x128xf32>
      %cst_54 = arith.constant 0.020833334 : f32
      %105 = vector.broadcast %cst_54 : f32 to vector<1x128xf32>
      %106 = arith.mulf %104, %105 : vector<1x128xf32>
      %c0_55 = arith.constant 0 : index
      %c0_56 = arith.constant 0 : index
      %107 = vector.load %arg15[%c0_55, %c0_56] : memref<128x128xf32, #tpu.memory_space<vmem>>, vector<128x128xf32>
      %cst_57 = arith.constant dense<0.000000e+00> : vector<1x128xf32>
      %108 = tpu.matmul %106, %107, %cst_57 {dimension_numbers = #tpu.dot_dimension_numbers<[1], [0], [0], [1], [0, 0, 1, 1], [], []>} : vector<1x128xf32>, vector<128x128xf32>, vector<1x128xf32> -> vector<1x128xf32>
      %c0_58 = arith.constant 0 : index
      %c0_59 = arith.constant 0 : index
      %109 = vector.load %arg16[%c0_58, %c0_59] : memref<1x128xf32, #tpu.memory_space<vmem>>, vector<1x128xf32>
      %110 = arith.addf %108, %109 : vector<1x128xf32>
      %111 = vector.shape_cast %110 : vector<1x128xf32> to vector<1x128xf32>
      %112 = vector.broadcast %111 : vector<1x128xf32> to vector<8x128xf32>
      %c0_60 = arith.constant 0 : index
      %c0_61 = arith.constant 0 : index
      %c0_62 = arith.constant 0 : index
      %113 = vector.load %arg17[%c0_60, %c0_61, %c0_62] : memref<1x8x128xf32, #tpu.memory_space<vmem>>, vector<1x8x128xf32>
      %114 = vector.shape_cast %113 : vector<1x8x128xf32> to vector<8x128xf32>
      %115 = vector.shape_cast %112 : vector<8x128xf32> to vector<1x8x128xf32>
      tpu.vector_store %arg17[%c0_60, %c0_61, %c0_62], %115 {strides = array<i32>} : memref<1x8x128xf32, #tpu.memory_space<vmem>>, vector<1x8x128xf32>,
    } else {
    }
    return
  }
  func.func @transform_0(%arg0: i32, %arg1: i32) -> (i32, i32, i32, i32) {
    %c0_i32 = arith.constant 0 : i32
    %c0_i32_0 = arith.constant 0 : i32
    %c0_i32_1 = arith.constant 0 : i32
    return %arg0, %arg1, %c0_i32, %c0_i32_0 : i32, i32, i32, i32
  }
  func.func @transform_1(%arg0: i32, %arg1: i32) -> (i32, i32) {
    %c0_i32 = arith.constant 0 : i32
    %c0_i32_0 = arith.constant 0 : i32
    %c0_i32_1 = arith.constant 0 : i32
    return %c0_i32, %c0_i32_0 : i32, i32
  }
  func.func @transform_2(%arg0: i32, %arg1: i32) -> (i32, i32) {
    %c0_i32 = arith.constant 0 : i32
    %c0_i32_0 = arith.constant 0 : i32
    %c0_i32_1 = arith.constant 0 : i32
    return %c0_i32, %c0_i32_0 : i32, i32
  }
  func.func @transform_3(%arg0: i32, %arg1: i32) -> (i32, i32) {
    %c0_i32 = arith.constant 0 : i32
    %c0_i32_0 = arith.constant 0 : i32
    %c0_i32_1 = arith.constant 0 : i32
    return %c0_i32, %c0_i32_0 : i32, i32
  }
  func.func @transform_4(%arg0: i32, %arg1: i32) -> (i32, i32) {
    %c0_i32 = arith.constant 0 : i32
    %c0_i32_0 = arith.constant 0 : i32
    %c0_i32_1 = arith.constant 0 : i32
    return %c0_i32, %c0_i32_0 : i32, i32
  }
  func.func @transform_5(%arg0: i32, %arg1: i32) -> (i32, i32) {
    %c0_i32 = arith.constant 0 : i32
    %c0_i32_0 = arith.constant 0 : i32
    %c0_i32_1 = arith.constant 0 : i32
    return %c0_i32, %c0_i32_0 : i32, i32
  }
  func.func @transform_6(%arg0: i32, %arg1: i32) -> (i32, i32) {
    %c0_i32 = arith.constant 0 : i32
    %c0_i32_0 = arith.constant 0 : i32
    %c0_i32_1 = arith.constant 0 : i32
    return %c0_i32, %c0_i32_0 : i32, i32
  }
  func.func @transform_7(%arg0: i32, %arg1: i32) -> (i32, i32) {
    %c0_i32 = arith.constant 0 : i32
    %c0_i32_0 = arith.constant 0 : i32
    %c0_i32_1 = arith.constant 0 : i32
    return %c0_i32, %c0_i32_0 : i32, i32
  }
  func.func @transform_8(%arg0: i32, %arg1: i32) -> (i32, i32) {
    %c0_i32 = arith.constant 0 : i32
    %c0_i32_0 = arith.constant 0 : i32
    %c0_i32_1 = arith.constant 0 : i32
    return %c0_i32, %c0_i32_0 : i32, i32
  }
  func.func @transform_9(%arg0: i32, %arg1: i32) -> (i32, i32) {
    %c0_i32 = arith.constant 0 : i32
    %c0_i32_0 = arith.constant 0 : i32
    %c0_i32_1 = arith.constant 0 : i32
    return %c0_i32, %c0_i32_0 : i32, i32
  }
  func.func @transform_10(%arg0: i32, %arg1: i32) -> (i32, i32) {
    %c0_i32 = arith.constant 0 : i32
    %c0_i32_0 = arith.constant 0 : i32
    %c0_i32_1 = arith.constant 0 : i32
    return %c0_i32, %c0_i32_0 : i32, i32
  }
  func.func @transform_11(%arg0: i32, %arg1: i32) -> (i32, i32) {
    %c0_i32 = arith.constant 0 : i32
    %c0_i32_0 = arith.constant 0 : i32
    %c0_i32_1 = arith.constant 0 : i32
    return %c0_i32, %c0_i32_0 : i32, i32
  }
  func.func @transform_12(%arg0: i32, %arg1: i32) -> (i32, i32) {
    %c0_i32 = arith.constant 0 : i32
    %c0_i32_0 = arith.constant 0 : i32
    %c0_i32_1 = arith.constant 0 : i32
    return %c0_i32, %c0_i32_0 : i32, i32
  }
  func.func @transform_13(%arg0: i32, %arg1: i32) -> (i32, i32) {
    %c0_i32 = arith.constant 0 : i32
    %c0_i32_0 = arith.constant 0 : i32
    %c0_i32_1 = arith.constant 0 : i32
    return %c0_i32, %c0_i32_0 : i32, i32
  }
  func.func @transform_14(%arg0: i32, %arg1: i32) -> (i32, i32) {
    %c0_i32 = arith.constant 0 : i32
    %c0_i32_0 = arith.constant 0 : i32
    %c0_i32_1 = arith.constant 0 : i32
    return %c0_i32, %c0_i32_0 : i32, i32
  }
  func.func @transform_15(%arg0: i32, %arg1: i32) -> (i32, i32, i32) {
    %c0_i32 = arith.constant 0 : i32
    %c0_i32_0 = arith.constant 0 : i32
    %c0_i32_1 = arith.constant 0 : i32
    return %arg0, %c0_i32, %c0_i32_0 : i32, i32, i32
  }
}

</mosaic_0001>

<llo_original>
// kernel: convnet2d_forward.1
$region0: #{convnet2d_forward.1}
  #allocation0 [shape = 'u32[]', space=smem, size = 0x4, offset = 0x4, fixed_abs, tag = 'smem constant byte address 0x4 - core index']
  #allocation1 [shape = 'u32[72,128]{1,0:T(1,128)}', space=vmem, size = 0x9000, scoped, tag = 'internal scratch']
  #allocation2 [shape = 'f32[1,128]{1,0:T(1,128)}', space=vmem, size = 0x200, scoped, tag = 'scratch operand']
  %s0 = inlined_call_operand.vmem [shape: f32[2,3,16,128], index: 0, kind: input, shape index: {}]
  %s1 = inlined_call_operand.hbm [shape: f32[384,128], index: 1, kind: input, shape index: {}]
  %s2 = inlined_call_operand.vmem [shape: f32[1,128], index: 2, kind: input, shape index: {}]
  %s3 = inlined_call_operand.hbm [shape: f32[384,128], index: 3, kind: input, shape index: {}]
  %s4 = inlined_call_operand.vmem [shape: f32[1,128], index: 4, kind: input, shape index: {}]
  %s5 = inlined_call_operand.hbm [shape: f32[384,128], index: 5, kind: input, shape index: {}]
  %s6 = inlined_call_operand.vmem [shape: f32[1,128], index: 6, kind: input, shape index: {}]
  %s7 = inlined_call_operand.hbm [shape: f32[384,128], index: 7, kind: input, shape index: {}]
  %s8 = inlined_call_operand.vmem [shape: f32[1,128], index: 8, kind: input, shape index: {}]
  %s9 = inlined_call_operand.hbm [shape: f32[384,128], index: 9, kind: input, shape index: {}]
  %s10 = inlined_call_operand.vmem [shape: f32[1,128], index: 10, kind: input, shape index: {}]
  %s11 = inlined_call_operand.hbm [shape: f32[384,128], index: 11, kind: input, shape index: {}]
  %s12 = inlined_call_operand.vmem [shape: f32[1,128], index: 12, kind: input, shape index: {}]
  %s13 = inlined_call_operand.vmem [shape: f32[128,128], index: 13, kind: input, shape index: {}]
  %s14 = inlined_call_operand.vmem [shape: f32[1,128], index: 14, kind: input, shape index: {}]
  %s15 = inlined_call_operand.vmem [shape: f32[2,8,128], index: 15, kind: output, shape index: {}]
  %s16 = sld [smem:[#allocation0]]
  $region125: #{convnet2d_forward.1} parent=0
    _
  %s18 = ssub.s32 1, %s16
  %s19 = scalar_select 0, %s18, %s16
  $region1: #{convnet2d_forward.1} parent=0
    #allocation3 [shape = 'u8[196608]{0}', space=vmem, size = 0x30000, scoped, tag = 'input window, operand 1, single buffered']
    #allocation4 [shape = 's32[2]{0}', space=sflag, size = 0x8, scoped, tag = 'scoped memory for convnet2d_forward.1']
    #allocation5 [shape = 'u8[196608]{0}', space=vmem, size = 0x30000, scoped, tag = 'input window, operand 3, single buffered']
    #allocation6 [shape = 's32[1]{0}', space=sflag, size = 0x4, scoped, tag = 'scoped memory for convnet2d_forward.1']
    #allocation7 [shape = 'u8[196608]{0}', space=vmem, size = 0x30000, scoped, tag = 'input window, operand 5, single buffered']
    #allocation8 [shape = 'u8[196608]{0}', space=vmem, size = 0x30000, scoped, tag = 'input window, operand 7, single buffered']
    #allocation9 [shape = 's32[1]{0}', space=sflag, size = 0x4, scoped, tag = 'scoped memory for convnet2d_forward.1']
    #allocation10 [shape = 'u8[196608]{0}', space=vmem, size = 0x30000, scoped, tag = 'input window, operand 9, single buffered']
    #allocation11 [shape = 'u8[196608]{0}', space=vmem, size = 0x30000, scoped, tag = 'input window, operand 11, single buffered']
    #allocation12 [shape = 's32[1]{0}', space=sflag, size = 0x4, scoped, tag = 'scoped memory for convnet2d_forward.1']
    %20 = vsyncpa [#allocation4], 0
    %21 = vsyncpa [#allocation6], 0
    %22 = vsyncpa [#allocation9], 0
    %23 = vsyncpa [#allocation12], 0
    loop: start=0, step=1, limit=4
    $region2: #{convnet2d_forward.1} parent=1 // loop_pre_header
      _
    $region3: #{convnet2d_forward.1} parent=1 // loop_header
      %s25 = sphi 0, %s29
      %p26 = scmp.ge.s32.totalorder %s25, 4
      %s32 = sphi 0, %s44
      %s33 = sphi 0, %s40
      %s34 = sphi 0, %s32
      %s35 = sphi 0, %s33
      %s36 = sphi 0, %s34
      %s37 = sphi 0, %s35
      %s49 = sphi 0, %s51
      %s52 = sphi 0, %s49
      %s53 = sphi 0, %s52
      %s69 = sphi 0, %s53
      %s73 = sphi 0, %s73
      %s75 = sphi 0, %s73
      %s76 = sphi 0, %s75
      %s90 = sphi 0, %s76
      %s94 = sphi 0, %s94
      %s96 = sphi 0, %s94
      %s97 = sphi 0, %s96
      %s111 = sphi 0, %s97
      %s115 = sphi 0, %s115
      %s117 = sphi 0, %s115
      %s118 = sphi 0, %s117
      %s132 = sphi 0, %s118
      %s136 = sphi 0, %s136
      %s138 = sphi 0, %s136
      %s139 = sphi 0, %s138
      %s153 = sphi 0, %s139
      %s157 = sphi 0, %s157
      %s159 = sphi 0, %s157
      %s160 = sphi 0, %s159
      %s174 = sphi 0, %s160
      %s178 = sphi 0, %s178
      %s180 = sphi 0, %s178
      %s181 = sphi 0, %s180
      %s195 = sphi 0, %s181
      %s199 = sphi 0, %s199
      %s201 = sphi 0, %s199
      %s202 = sphi 0, %s201
      %s216 = sphi 0, %s202
      %s220 = sphi 0, %s220
      %s222 = sphi 0, %s220
      %s223 = sphi 0, %s222
      %s237 = sphi 0, %s223
      %s241 = sphi 0, %s241
      %s243 = sphi 0, %s241
      %s244 = sphi 0, %s243
      %s258 = sphi 0, %s244
      %s262 = sphi 0, %s262
      %s264 = sphi 0, %s262
      %s265 = sphi 0, %s264
      %s279 = sphi 0, %s265
      %s283 = sphi 0, %s283
      %s285 = sphi 0, %s283
      %s286 = sphi 0, %s285
      %s300 = sphi 0, %s286
      %s304 = sphi 0, %s304
      %s306 = sphi 0, %s304
      %s307 = sphi 0, %s306
      %s321 = sphi 0, %s307
      %s325 = sphi 0, %s325
      %s327 = sphi 0, %s325
      %s328 = sphi 0, %s327
      %s342 = sphi 0, %s328
      %s346 = sphi 0, %s346
      %s348 = sphi 0, %s346
      %s349 = sphi 0, %s348
      %s363 = sphi 0, %s349
      %s369 = sphi 0, %s371
      %s372 = sphi 0, %s369
      %s373 = sphi 0, %s372
      %s389 = sphi 0, %s373
    $region4: #{convnet2d_forward.1} parent=1 // loop_header_branch
      %28 = sbr.rel (%p26) target = $region8
    $region5: #{convnet2d_forward.1} parent=1 // loop_body
      %s30 = ssub.s32 %s25, 1
      %s31 = ssub.s32 %s25, 2
      %s38 = sadd.s32 1, %s33
      %p39 = scmp.ge.s32.totalorder %s38, 1
      %s40 = scalar_select %p39, 0, %s38
      %s41 = sadd.s32 1, %s32
      %s42 = scalar_select %p39, %s41, %s32
      %p43 = scmp.ge.s32.totalorder %s42, 2
      %s44 = scalar_select %p43, 0, %s42
      %s45 = ssub.s32 %s32, %s44
      %s46 = ssub.s32 %s33, %s40
      %s47 = sor.u32 %s45, %s46
      %p48 = scmp.eq.s32.totalorder %s47, 0
      %s50 = sadd.s32 %s49, 1
      %s51 = scalar_select %p48, %s49, %s50
      %p54 = pneg %p48
      %p55 = scmp.eq.s32.totalorder %s25, 1
      %p56 = por %p54, %p55
      %p57 = scmp.ne.s32.totalorder %s49, %s52
      %p58 = scmp.eq.s32.totalorder %s25, 0
      %p59 = por %p57, %p58
      %p60 = scmp.ne.s32.totalorder %s49, %s52
      %p61 = scmp.eq.s32.totalorder %s30, 1
      %p62 = por %p60, %p61
      %p63 = scmp.ne.s32.totalorder %s52, %s53
      %p64 = scmp.eq.s32.totalorder %s30, 0
      %p65 = por %p63, %p64
      %p66 = scmp.ne.s32.totalorder %s52, %s53
      %p67 = scmp.eq.s32.totalorder %s31, 1
      %p68 = por %p66, %p67
      %p70 = scmp.ne.s32.totalorder %s53, %s69
      %p71 = scmp.eq.s32.totalorder %s31, 0
      %p72 = por %p70, %p71
      %s74 = sadd.s32 %s73, 1
      %p77 = scmp.eq.s32.totalorder %s25, 1
      %p78 = scmp.ne.s32.totalorder %s73, %s75
      %p79 = scmp.eq.s32.totalorder %s25, 0
      %p80 = por %p78, %p79
      %p81 = scmp.ne.s32.totalorder %s73, %s75
      %p82 = scmp.eq.s32.totalorder %s30, 1
      %p83 = por %p81, %p82
      %p84 = scmp.ne.s32.totalorder %s75, %s76
      %p85 = scmp.eq.s32.totalorder %s30, 0
      %p86 = por %p84, %p85
      %p87 = scmp.ne.s32.totalorder %s75, %s76
      %p88 = scmp.eq.s32.totalorder %s31, 1
      %p89 = por %p87, %p88
      %p91 = scmp.ne.s32.totalorder %s76, %s90
      %p92 = scmp.eq.s32.totalorder %s31, 0
      %p93 = por %p91, %p92
      %s95 = sadd.s32 %s94, 1
      %p98 = scmp.eq.s32.totalorder %s25, 1
      %p99 = scmp.ne.s32.totalorder %s94, %s96
      %p100 = scmp.eq.s32.totalorder %s25, 0
      %p101 = por %p99, %p100
      %p102 = scmp.ne.s32.totalorder %s94, %s96
      %p103 = scmp.eq.s32.totalorder %s30, 1
      %p104 = por %p102, %p103
      %p105 = scmp.ne.s32.totalorder %s96, %s97
      %p106 = scmp.eq.s32.totalorder %s30, 0
      %p107 = por %p105, %p106
      %p108 = scmp.ne.s32.totalorder %s96, %s97
      %p109 = scmp.eq.s32.totalorder %s31, 1
      %p110 = por %p108, %p109
      %p112 = scmp.ne.s32.totalorder %s97, %s111
      %p113 = scmp.eq.s32.totalorder %s31, 0
      %p114 = por %p112, %p113
      %s116 = sadd.s32 %s115, 1
      %p119 = scmp.eq.s32.totalorder %s25, 1
      %p120 = scmp.ne.s32.totalorder %s115, %s117
      %p121 = scmp.eq.s32.totalorder %s25, 0
      %p122 = por %p120, %p121
      %p123 = scmp.ne.s32.totalorder %s115, %s117
      %p124 = scmp.eq.s32.totalorder %s30, 1
      %p125 = por %p123, %p124
      %p126 = scmp.ne.s32.totalorder %s117, %s118
      %p127 = scmp.eq.s32.totalorder %s30, 0
      %p128 = por %p126, %p127
      %p129 = scmp.ne.s32.totalorder %s117, %s118
      %p130 = scmp.eq.s32.totalorder %s31, 1
      %p131 = por %p129, %p130
      %p133 = scmp.ne.s32.totalorder %s118, %s132
      %p134 = scmp.eq.s32.totalorder %s31, 0
      %p135 = por %p133, %p134
      %s137 = sadd.s32 %s136, 1
      %p140 = scmp.eq.s32.totalorder %s25, 1
      %p141 = scmp.ne.s32.totalorder %s136, %s138
      %p142 = scmp.eq.s32.totalorder %s25, 0
      %p143 = por %p141, %p142
      %p144 = scmp.ne.s32.totalorder %s136, %s138
      %p145 = scmp.eq.s32.totalorder %s30, 1
      %p146 = por %p144, %p145
      %p147 = scmp.ne.s32.totalorder %s138, %s139
      %p148 = scmp.eq.s32.totalorder %s30, 0
      %p149 = por %p147, %p148
      %p150 = scmp.ne.s32.totalorder %s138, %s139
      %p151 = scmp.eq.s32.totalorder %s31, 1
      %p152 = por %p150, %p151
      %p154 = scmp.ne.s32.totalorder %s139, %s153
      %p155 = scmp.eq.s32.totalorder %s31, 0
      %p156 = por %p154, %p155
      %s158 = sadd.s32 %s157, 1
      %p161 = scmp.eq.s32.totalorder %s25, 1
      %p162 = scmp.ne.s32.totalorder %s157, %s159
      %p163 = scmp.eq.s32.totalorder %s25, 0
      %p164 = por %p162, %p163
      %p165 = scmp.ne.s32.totalorder %s157, %s159
      %p166 = scmp.eq.s32.totalorder %s30, 1
      %p167 = por %p165, %p166
      %p168 = scmp.ne.s32.totalorder %s159, %s160
      %p169 = scmp.eq.s32.totalorder %s30, 0
      %p170 = por %p168, %p169
      %p171 = scmp.ne.s32.totalorder %s159, %s160
      %p172 = scmp.eq.s32.totalorder %s31, 1
      %p173 = por %p171, %p172
      %p175 = scmp.ne.s32.totalorder %s160, %s174
      %p176 = scmp.eq.s32.totalorder %s31, 0
      %p177 = por %p175, %p176
      %s179 = sadd.s32 %s178, 1
      %p182 = scmp.eq.s32.totalorder %s25, 1
      %p183 = scmp.ne.s32.totalorder %s178, %s180
      %p184 = scmp.eq.s32.totalorder %s25, 0
      %p185 = por %p183, %p184
      %p186 = scmp.ne.s32.totalorder %s178, %s180
      %p187 = scmp.eq.s32.totalorder %s30, 1
      %p188 = por %p186, %p187
      %p189 = scmp.ne.s32.totalorder %s180, %s181
      %p190 = scmp.eq.s32.totalorder %s30, 0
      %p191 = por %p189, %p190
      %p192 = scmp.ne.s32.totalorder %s180, %s181
      %p193 = scmp.eq.s32.totalorder %s31, 1
      %p194 = por %p192, %p193
      %p196 = scmp.ne.s32.totalorder %s181, %s195
      %p197 = scmp.eq.s32.totalorder %s31, 0
      %p198 = por %p196, %p197
      %s200 = sadd.s32 %s199, 1
      %p203 = scmp.eq.s32.totalorder %s25, 1
      %p204 = scmp.ne.s32.totalorder %s199, %s201
      %p205 = scmp.eq.s32.totalorder %s25, 0
      %p206 = por %p204, %p205
      %p207 = scmp.ne.s32.totalorder %s199, %s201
      %p208 = scmp.eq.s32.totalorder %s30, 1
      %p209 = por %p207, %p208
      %p210 = scmp.ne.s32.totalorder %s201, %s202
      %p211 = scmp.eq.s32.totalorder %s30, 0
      %p212 = por %p210, %p211
      %p213 = scmp.ne.s32.totalorder %s201, %s202
      %p214 = scmp.eq.s32.totalorder %s31, 1
      %p215 = por %p213, %p214
      %p217 = scmp.ne.s32.totalorder %s202, %s216
      %p218 = scmp.eq.s32.totalorder %s31, 0
      %p219 = por %p217, %p218
      %s221 = sadd.s32 %s220, 1
      %p224 = scmp.eq.s32.totalorder %s25, 1
      %p225 = scmp.ne.s32.totalorder %s220, %s222
      %p226 = scmp.eq.s32.totalorder %s25, 0
      %p227 = por %p225, %p226
      %p228 = scmp.ne.s32.totalorder %s220, %s222
      %p229 = scmp.eq.s32.totalorder %s30, 1
      %p230 = por %p228, %p229
      %p231 = scmp.ne.s32.totalorder %s222, %s223
      %p232 = scmp.eq.s32.totalorder %s30, 0
      %p233 = por %p231, %p232
      %p234 = scmp.ne.s32.totalorder %s222, %s223
      %p235 = scmp.eq.s32.totalorder %s31, 1
      %p236 = por %p234, %p235
      %p238 = scmp.ne.s32.totalorder %s223, %s237
      %p239 = scmp.eq.s32.totalorder %s31, 0
      %p240 = por %p238, %p239
      %s242 = sadd.s32 %s241, 1
      %p245 = scmp.eq.s32.totalorder %s25, 1
      %p246 = scmp.ne.s32.totalorder %s241, %s243
      %p247 = scmp.eq.s32.totalorder %s25, 0
      %p248 = por %p246, %p247
      %p249 = scmp.ne.s32.totalorder %s241, %s243
      %p250 = scmp.eq.s32.totalorder %s30, 1
      %p251 = por %p249, %p250
      %p252 = scmp.ne.s32.totalorder %s243, %s244
      %p253 = scmp.eq.s32.totalorder %s30, 0
      %p254 = por %p252, %p253
      %p255 = scmp.ne.s32.totalorder %s243, %s244
      %p256 = scmp.eq.s32.totalorder %s31, 1
      %p257 = por %p255, %p256
      %p259 = scmp.ne.s32.totalorder %s244, %s258
      %p260 = scmp.eq.s32.totalorder %s31, 0
      %p261 = por %p259, %p260
      %s263 = sadd.s32 %s262, 1
      %p266 = scmp.eq.s32.totalorder %s25, 1
      %p267 = scmp.ne.s32.totalorder %s262, %s264
      %p268 = scmp.eq.s32.totalorder %s25, 0
      %p269 = por %p267, %p268
      %p270 = scmp.ne.s32.totalorder %s262, %s264
      %p271 = scmp.eq.s32.totalorder %s30, 1
      %p272 = por %p270, %p271
      %p273 = scmp.ne.s32.totalorder %s264, %s265
      %p274 = scmp.eq.s32.totalorder %s30, 0
      %p275 = por %p273, %p274
      %p276 = scmp.ne.s32.totalorder %s264, %s265
      %p277 = scmp.eq.s32.totalorder %s31, 1
      %p278 = por %p276, %p277
      %p280 = scmp.ne.s32.totalorder %s265, %s279
      %p281 = scmp.eq.s32.totalorder %s31, 0
      %p282 = por %p280, %p281
      %s284 = sadd.s32 %s283, 1
      %p287 = scmp.eq.s32.totalorder %s25, 1
      %p288 = scmp.ne.s32.totalorder %s283, %s285
      %p289 = scmp.eq.s32.totalorder %s25, 0
      %p290 = por %p288, %p289
      %p291 = scmp.ne.s32.totalorder %s283, %s285
      %p292 = scmp.eq.s32.totalorder %s30, 1
      %p293 = por %p291, %p292
      %p294 = scmp.ne.s32.totalorder %s285, %s286
      %p295 = scmp.eq.s32.totalorder %s30, 0
      %p296 = por %p294, %p295
      %p297 = scmp.ne.s32.totalorder %s285, %s286
      %p298 = scmp.eq.s32.totalorder %s31, 1
      %p299 = por %p297, %p298
      %p301 = scmp.ne.s32.totalorder %s286, %s300
      %p302 = scmp.eq.s32.totalorder %s31, 0
      %p303 = por %p301, %p302
      %s305 = sadd.s32 %s304, 1
      %p308 = scmp.eq.s32.totalorder %s25, 1
      %p309 = scmp.ne.s32.totalorder %s304, %s306
      %p310 = scmp.eq.s32.totalorder %s25, 0
      %p311 = por %p309, %p310
      %p312 = scmp.ne.s32.totalorder %s304, %s306
      %p313 = scmp.eq.s32.totalorder %s30, 1
      %p314 = por %p312, %p313
      %p315 = scmp.ne.s32.totalorder %s306, %s307
      %p316 = scmp.eq.s32.totalorder %s30, 0
      %p317 = por %p315, %p316
      %p318 = scmp.ne.s32.totalorder %s306, %s307
      %p319 = scmp.eq.s32.totalorder %s31, 1
      %p320 = por %p318, %p319
      %p322 = scmp.ne.s32.totalorder %s307, %s321
      %p323 = scmp.eq.s32.totalorder %s31, 0
      %p324 = por %p322, %p323
      %s326 = sadd.s32 %s325, 1
      %p329 = scmp.eq.s32.totalorder %s25, 1
      %p330 = scmp.ne.s32.totalorder %s325, %s327
      %p331 = scmp.eq.s32.totalorder %s25, 0
      %p332 = por %p330, %p331
      %p333 = scmp.ne.s32.totalorder %s325, %s327
      %p334 = scmp.eq.s32.totalorder %s30, 1
      %p335 = por %p333, %p334
      %p336 = scmp.ne.s32.totalorder %s327, %s328
      %p337 = scmp.eq.s32.totalorder %s30, 0
      %p338 = por %p336, %p337
      %p339 = scmp.ne.s32.totalorder %s327, %s328
      %p340 = scmp.eq.s32.totalorder %s31, 1
      %p341 = por %p339, %p340
      %p343 = scmp.ne.s32.totalorder %s328, %s342
      %p344 = scmp.eq.s32.totalorder %s31, 0
      %p345 = por %p343, %p344
      %s347 = sadd.s32 %s346, 1
      %p350 = scmp.eq.s32.totalorder %s25, 1
      %p351 = scmp.ne.s32.totalorder %s346, %s348
      %p352 = scmp.eq.s32.totalorder %s25, 0
      %p353 = por %p351, %p352
      %p354 = scmp.ne.s32.totalorder %s346, %s348
      %p355 = scmp.eq.s32.totalorder %s30, 1
      %p356 = por %p354, %p355
      %p357 = scmp.ne.s32.totalorder %s348, %s349
      %p358 = scmp.eq.s32.totalorder %s30, 0
      %p359 = por %p357, %p358
      %p360 = scmp.ne.s32.totalorder %s348, %s349
      %p361 = scmp.eq.s32.totalorder %s31, 1
      %p362 = por %p360, %p361
      %p364 = scmp.ne.s32.totalorder %s349, %s363
      %p365 = scmp.eq.s32.totalorder %s31, 0
      %p366 = por %p364, %p365
      %s367 = ssub.s32 %s32, %s44
      %p368 = scmp.eq.s32.totalorder %s367, 0
      %s370 = sadd.s32 %s369, 1
      %s371 = scalar_select %p368, %s369, %s370
      %p374 = pneg %p368
      %p375 = scmp.eq.s32.totalorder %s25, 1
      %p376 = por %p374, %p375
      %p377 = scmp.ne.s32.totalorder %s369, %s372
      %p378 = scmp.eq.s32.totalorder %s25, 0
      %p379 = por %p377, %p378
      %p380 = scmp.ne.s32.totalorder %s369, %s372
      %p381 = scmp.eq.s32.totalorder %s30, 1
      %p382 = por %p380, %p381
      %p383 = scmp.ne.s32.totalorder %s372, %s373
      %p384 = scmp.eq.s32.totalorder %s30, 0
      %p385 = por %p383, %p384
      %p386 = scmp.ne.s32.totalorder %s372, %s373
      %p387 = scmp.eq.s32.totalorder %s31, 1
      %p388 = por %p386, %p387
      %p390 = scmp.ne.s32.totalorder %s373, %s389
      %p391 = scmp.eq.s32.totalorder %s31, 0
      %p392 = por %p390, %p391
      %p393 = scmp.le.s32.totalorder 1, %s25
      %p394 = scmp.lt.s32.totalorder %s25, 3
      %p395 = pnand %p393, %p394
      %p396 = pneg %p395
      // Predicated region
      $region9: #{convnet2d_forward.1} parent=5 // pred_check
        _
      $region10: #{convnet2d_forward.1} parent=5 // pred_check_branch
        %398 = sbr.rel (%p395) target = $region12
      $region11: #{convnet2d_forward.1} parent=5 // pred_region
        %s399 = ssub.s32 %s25, 1
        // Predicated region
        $region13: #{convnet2d_forward.1} parent=11 // pred_check
          %p400 = pneg %p86
        $region14: #{convnet2d_forward.1} parent=11 // pred_check_branch
          %402 = sbr.rel (%p400) target = $region16
        $region15: #{convnet2d_forward.1} parent=11 // pred_region
          %404 = vsyncadd [#allocation4], 0
          %s405 = sshll.u32 %s1, 4
          %s406 = int_to_ptr.hbm [resolvable:$true] %s405
          %s407 = sshll.u32 [#allocation3], 4
          %s408 = int_to_ptr.vmem [resolvable:$true] %s407
          %413 = dma.hbm_to_vmem [thread:$0]  %s406, 6144, %s408, [#allocation4], 128, 128, 8
        $region16: #{convnet2d_forward.1} parent=11 // pred_fallthru
          _
        // Predicated region
        $region17: #{convnet2d_forward.1} parent=11 // pred_check
          %p414 = pneg %p107
        $region18: #{convnet2d_forward.1} parent=11 // pred_check_branch
          %416 = sbr.rel (%p414) target = $region20
        $region19: #{convnet2d_forward.1} parent=11 // pred_region
          _
        $region20: #{convnet2d_forward.1} parent=11 // pred_fallthru
          _
        // Predicated region
        $region21: #{convnet2d_forward.1} parent=11 // pred_check
          %p417 = pneg %p128
        $region22: #{convnet2d_forward.1} parent=11 // pred_check_branch
          %419 = sbr.rel (%p417) target = $region24
        $region23: #{convnet2d_forward.1} parent=11 // pred_region
          %421 = vsyncadd [#allocation6], 0
          %s422 = sshll.u32 %s3, 4
          %s423 = int_to_ptr.hbm [resolvable:$true] %s422
          %s424 = sshll.u32 [#allocation5], 4
          %s425 = int_to_ptr.vmem [resolvable:$true] %s424
          %430 = dma.hbm_to_vmem [thread:$0]  %s423, 6144, %s425, [#allocation6], 128, 128, 8
        $region24: #{convnet2d_forward.1} parent=11 // pred_fallthru
          _
        // Predicated region
        $region25: #{convnet2d_forward.1} parent=11 // pred_check
          %p431 = pneg %p149
        $region26: #{convnet2d_forward.1} parent=11 // pred_check_branch
          %433 = sbr.rel (%p431) target = $region28
        $region27: #{convnet2d_forward.1} parent=11 // pred_region
          _
        $region28: #{convnet2d_forward.1} parent=11 // pred_fallthru
          _
        // Predicated region
        $region29: #{convnet2d_forward.1} parent=11 // pred_check
          %p434 = pneg %p170
        $region30: #{convnet2d_forward.1} parent=11 // pred_check_branch
          %436 = sbr.rel (%p434) target = $region32
        $region31: #{convnet2d_forward.1} parent=11 // pred_region
          %438 = vsyncadd [#allocation6], 0
          %s439 = sshll.u32 %s5, 4
          %s440 = int_to_ptr.hbm [resolvable:$true] %s439
          %s441 = sshll.u32 [#allocation7], 4
          %s442 = int_to_ptr.vmem [resolvable:$true] %s441
          %447 = dma.hbm_to_vmem [thread:$0]  %s440, 6144, %s442, [#allocation6], 128, 128, 8
        $region32: #{convnet2d_forward.1} parent=11 // pred_fallthru
          _
        // Predicated region
        $region33: #{convnet2d_forward.1} parent=11 // pred_check
          %p448 = pneg %p191
        $region34: #{convnet2d_forward.1} parent=11 // pred_check_branch
          %450 = sbr.rel (%p448) target = $region36
        $region35: #{convnet2d_forward.1} parent=11 // pred_region
          _
        $region36: #{convnet2d_forward.1} parent=11 // pred_fallthru
          _
        // Predicated region
        $region37: #{convnet2d_forward.1} parent=11 // pred_check
          %p451 = pneg %p212
        $region38: #{convnet2d_forward.1} parent=11 // pred_check_branch
          %453 = sbr.rel (%p451) target = $region40
        $region39: #{convnet2d_forward.1} parent=11 // pred_region
          %455 = vsyncadd [#allocation9], 0
          %s456 = sshll.u32 %s7, 4
          %s457 = int_to_ptr.hbm [resolvable:$true] %s456
          %s458 = sshll.u32 [#allocation8], 4
          %s459 = int_to_ptr.vmem [resolvable:$true] %s458
          %464 = dma.hbm_to_vmem [thread:$0]  %s457, 6144, %s459, [#allocation9], 128, 128, 8
        $region40: #{convnet2d_forward.1} parent=11 // pred_fallthru
          _
        // Predicated region
        $region41: #{convnet2d_forward.1} parent=11 // pred_check
          %p465 = pneg %p233
        $region42: #{convnet2d_forward.1} parent=11 // pred_check_branch
          %467 = sbr.rel (%p465) target = $region44
        $region43: #{convnet2d_forward.1} parent=11 // pred_region
          _
        $region44: #{convnet2d_forward.1} parent=11 // pred_fallthru
          _
        // Predicated region
        $region45: #{convnet2d_forward.1} parent=11 // pred_check
          %p468 = pneg %p254
        $region46: #{convnet2d_forward.1} parent=11 // pred_check_branch
          %470 = sbr.rel (%p468) target = $region48
        $region47: #{convnet2d_forward.1} parent=11 // pred_region
          %472 = vsyncadd [#allocation9], 0
          %s473 = sshll.u32 %s9, 4
          %s474 = int_to_ptr.hbm [resolvable:$true] %s473
          %s475 = sshll.u32 [#allocation10], 4
          %s476 = int_to_ptr.vmem [resolvable:$true] %s475
          %481 = dma.hbm_to_vmem [thread:$0]  %s474, 6144, %s476, [#allocation9], 128, 128, 8
        $region48: #{convnet2d_forward.1} parent=11 // pred_fallthru
          _
        // Predicated region
        $region49: #{convnet2d_forward.1} parent=11 // pred_check
          %p482 = pneg %p275
        $region50: #{convnet2d_forward.1} parent=11 // pred_check_branch
          %484 = sbr.rel (%p482) target = $region52
        $region51: #{convnet2d_forward.1} parent=11 // pred_region
          _
        $region52: #{convnet2d_forward.1} parent=11 // pred_fallthru
          _
        // Predicated region
        $region53: #{convnet2d_forward.1} parent=11 // pred_check
          %p485 = pneg %p296
        $region54: #{convnet2d_forward.1} parent=11 // pred_check_branch
          %487 = sbr.rel (%p485) target = $region56
        $region55: #{convnet2d_forward.1} parent=11 // pred_region
          %489 = vsyncadd [#allocation12], 0
          %s490 = sshll.u32 %s11, 4
          %s491 = int_to_ptr.hbm [resolvable:$true] %s490
          %s492 = sshll.u32 [#allocation11], 4
          %s493 = int_to_ptr.vmem [resolvable:$true] %s492
          %498 = dma.hbm_to_vmem [thread:$0]  %s491, 6144, %s493, [#allocation12], 128, 128, 8
        $region56: #{convnet2d_forward.1} parent=11 // pred_fallthru
          _
        // Predicated region
        $region57: #{convnet2d_forward.1} parent=11 // pred_check
          %p499 = pneg %p317
        $region58: #{convnet2d_forward.1} parent=11 // pred_check_branch
          %501 = sbr.rel (%p499) target = $region60
        $region59: #{convnet2d_forward.1} parent=11 // pred_region
          _
        $region60: #{convnet2d_forward.1} parent=11 // pred_fallthru
          _
        // Predicated region
        $region61: #{convnet2d_forward.1} parent=11 // pred_check
          %p502 = pneg %p338
        $region62: #{convnet2d_forward.1} parent=11 // pred_check_branch
          %504 = sbr.rel (%p502) target = $region64
        $region63: #{convnet2d_forward.1} parent=11 // pred_region
          _
        $region64: #{convnet2d_forward.1} parent=11 // pred_fallthru
          _
        // Predicated region
        $region65: #{convnet2d_forward.1} parent=11 // pred_check
          %p505 = pneg %p359
        $region66: #{convnet2d_forward.1} parent=11 // pred_check_branch
          %507 = sbr.rel (%p505) target = $region68
        $region67: #{convnet2d_forward.1} parent=11 // pred_region
          _
        $region68: #{convnet2d_forward.1} parent=11 // pred_fallthru
          _
      $region12: #{convnet2d_forward.1} parent=5 // pred_fallthru
        _
      %p508 = scmp.lt.s32.totalorder %s25, 2
      // Predicated region
      $region69: #{convnet2d_forward.1} parent=5 // pred_check
        %p509 = pneg %p508
      $region70: #{convnet2d_forward.1} parent=5 // pred_check_branch
        %511 = sbr.rel (%p509) target = $region72
      $region71: #{convnet2d_forward.1} parent=5 // pred_region
        // Predicated region
        $region73: #{convnet2d_forward.1} parent=71 // pred_check
          %p512 = pneg %p59
        $region74: #{convnet2d_forward.1} parent=71 // pred_check_branch
          %514 = sbr.rel (%p512) target = $region76
        $region75: #{convnet2d_forward.1} parent=71 // pred_region
          %s515 = smul.u32 3, %s33
          %p516 = scmp.lt.s32.totalorder %s32, 1
          %s517 = scalar_select %p516, %s32, 1
          %p518 = scmp.lt.s32.totalorder %s515, 2
          %s519 = scalar_select %p518, %s515, 2
          %s520 = smul.addr %s519, 2
          %s521 = smul.addr %s517, 6
          %s522 = sadd.s32 %s520, %s521
          %s523 = smul.addr %s522, 8
          %s524 = scalar_lea.vmem %s0, %s523
          %s525 = smul.u32 3, %s33
        $region76: #{convnet2d_forward.1} parent=71 // pred_fallthru
          _
      $region72: #{convnet2d_forward.1} parent=5 // pred_fallthru
        _
      %p526 = scmp.le.s32.totalorder 1, %s25
      %p527 = scmp.lt.s32.totalorder %s25, 3
      %p528 = pnand %p526, %p527
      %p529 = pneg %p528
      // Predicated region
      $region77: #{convnet2d_forward.1} parent=5 // pred_check
        _
      $region78: #{convnet2d_forward.1} parent=5 // pred_check_branch
        %531 = sbr.rel (%p528) target = $region80
      $region79: #{convnet2d_forward.1} parent=5 // pred_region
        %s532 = ssub.s32 %s25, 1
        // Predicated region
        $region81: #{convnet2d_forward.1} parent=79 // pred_check
          %p533 = pneg %p86
        $region82: #{convnet2d_forward.1} parent=79 // pred_check_branch
          %535 = sbr.rel (%p533) target = $region84
        $region83: #{convnet2d_forward.1} parent=79 // pred_region
          %537 = dma.done [#allocation4], 6144
        $region84: #{convnet2d_forward.1} parent=79 // pred_fallthru
          _
        // Predicated region
        $region85: #{convnet2d_forward.1} parent=79 // pred_check
          %p538 = pneg %p128
        $region86: #{convnet2d_forward.1} parent=79 // pred_check_branch
          %540 = sbr.rel (%p538) target = $region88
        $region87: #{convnet2d_forward.1} parent=79 // pred_region
          %542 = dma.done [#allocation6], 6144
        $region88: #{convnet2d_forward.1} parent=79 // pred_fallthru
          _
        // Predicated region
        $region89: #{convnet2d_forward.1} parent=79 // pred_check
          %p543 = pneg %p170
        $region90: #{convnet2d_forward.1} parent=79 // pred_check_branch
          %545 = sbr.rel (%p543) target = $region92
        $region91: #{convnet2d_forward.1} parent=79 // pred_region
          %547 = dma.done [#allocation6], 6144
        $region92: #{convnet2d_forward.1} parent=79 // pred_fallthru
          _
        // Predicated region
        $region93: #{convnet2d_forward.1} parent=79 // pred_check
          %p548 = pneg %p212
        $region94: #{convnet2d_forward.1} parent=79 // pred_check_branch
          %550 = sbr.rel (%p548) target = $region96
        $region95: #{convnet2d_forward.1} parent=79 // pred_region
          %552 = dma.done [#allocation9], 6144
        $region96: #{convnet2d_forward.1} parent=79 // pred_fallthru
          _
        // Predicated region
        $region97: #{convnet2d_forward.1} parent=79 // pred_check
          %p553 = pneg %p254
        $region98: #{convnet2d_forward.1} parent=79 // pred_check_branch
          %555 = sbr.rel (%p553) target = $region100
        $region99: #{convnet2d_forward.1} parent=79 // pred_region
          %557 = dma.done [#allocation9], 6144
        $region100: #{convnet2d_forward.1} parent=79 // pred_fallthru
          _
        // Predicated region
        $region101: #{convnet2d_forward.1} parent=79 // pred_check
          %p558 = pneg %p296
        $region102: #{convnet2d_forward.1} parent=79 // pred_check_branch
          %560 = sbr.rel (%p558) target = $region104
        $region103: #{convnet2d_forward.1} parent=79 // pred_region
          %562 = dma.done [#allocation12], 6144
        $region104: #{convnet2d_forward.1} parent=79 // pred_fallthru
          _
        %s563 = smul.u32 3, %s35
        %p564 = scmp.lt.s32.totalorder %s34, 1
        %s565 = scalar_select %p564, %s34, 1
        %p566 = scmp.lt.s32.totalorder %s563, 2
        %s567 = scalar_select %p566, %s563, 2
        %s568 = smul.addr %s567, 2
        %s569 = smul.addr %s565, 6
        %s570 = sadd.s32 %s568, %s569
        %s571 = smul.addr %s570, 8
        %s572 = scalar_lea.vmem %s0, %s571
        %p573 = pneg %p65
        %p574 = pneg %p62
        %p575 = pneg %p86
        %p576 = pneg %p83
        %p577 = pneg %p107
        %p578 = pneg %p104
        %p579 = pneg %p128
        %p580 = pneg %p125
        %p581 = pneg %p149
        %p582 = pneg %p146
        %p583 = pneg %p170
        %p584 = pneg %p167
        %p585 = pneg %p191
        %p586 = pneg %p188
        %p587 = pneg %p212
        %p588 = pneg %p209
        %p589 = pneg %p233
        %p590 = pneg %p230
        %p591 = pneg %p254
        %p592 = pneg %p251
        %p593 = pneg %p275
        %p594 = pneg %p272
        %p595 = pneg %p296
        %p596 = pneg %p293
        %p597 = pneg %p317
        %p598 = pneg %p314
        %p599 = pneg %p338
        %p600 = pneg %p335
        %p601 = pneg %p359
        %p602 = pneg %p356
        %p603 = pneg %p385
        %p604 = pneg %p382
        %p605 = scmp.lt.s32.totalorder %s34, 1
        %s606 = scalar_select %p605, %s34, 1
        %s607 = smul.addr %s606, 8
        %s608 = scalar_lea.vmem %s15, %s607
        %s609 = smul.u32 3, %s35
        %p610 = scmp.lt.s32.totalorder %s34, 1
        %s611 = scalar_select %p610, %s34, 1
        %p612 = scmp.lt.s32.totalorder %s609, 2
        %s613 = scalar_select %p612, %s609, 2
        %s614 = smul.addr %s613, 2
        %s615 = smul.addr %s611, 6
        %s616 = sadd.s32 %s614, %s615
        %s617 = smul.addr %s616, 8
        %s618 = scalar_lea.vmem %s0, %s617
        %s619 = smul.u32 3, %s35
        %p620 = scmp.lt.s32.totalorder %s34, 1
        %s621 = scalar_select %p620, %s34, 1
        %s622 = smul.addr %s621, 8
        %s623 = scalar_lea.vmem %s15, %s622
        %v624 = vld [vmem:[%s618] sm:$0xff]
        %v625 = vld [vmem:[%s618 + $0x8] sm:$0xff]
        %v626 = vld [vmem:[%s618 + $0x10] sm:$0xff]
        %v627 = vld [vmem:[%s618 + $0x18] sm:$0xff]
        %v628 = vld [vmem:[%s618 + $0x20] sm:$0xff]
        %v629 = vld [vmem:[%s618 + $0x28] sm:$0xff]
        %v630 = vld [vmem:[#allocation3] sm:$0xff]
        %v631 = vld [vmem:[#allocation3 + $0x8] sm:$0xff]
        %v632 = vld [vmem:[#allocation3 + $0x10] sm:$0xff]
        %v633 = vld [vmem:[#allocation3 + $0x18] sm:$0xff]
        %v634 = vld [vmem:[#allocation3 + $0x20] sm:$0xff]
        %v635 = vld [vmem:[#allocation3 + $0x28] sm:$0xff]
        %v636 = vld [vmem:[#allocation3 + $0x30] sm:$0xff]
        %v637 = vld [vmem:[#allocation3 + $0x38] sm:$0xff]
        %v638 = vld [vmem:[#allocation3 + $0x40] sm:$0xff]
        %v639 = vld [vmem:[#allocation3 + $0x48] sm:$0xff]
        %v640 = vld [vmem:[#allocation3 + $0x50] sm:$0xff]
        %v641 = vld [vmem:[#allocation3 + $0x58] sm:$0xff]
        %v642 = vld [vmem:[#allocation3 + $0x60] sm:$0xff]
        %v643 = vld [vmem:[#allocation3 + $0x68] sm:$0xff]
        %v644 = vld [vmem:[#allocation3 + $0x70] sm:$0xff]
        %v645 = vld [vmem:[#allocation3 + $0x78] sm:$0xff]
        %v646 = vld [vmem:[#allocation3 + $0x80] sm:$0xff]
        %v647 = vld [vmem:[#allocation3 + $0x88] sm:$0xff]
        %v648 = vld [vmem:[#allocation3 + $0x90] sm:$0xff]
        %v649 = vld [vmem:[#allocation3 + $0x98] sm:$0xff]
        %v650 = vld [vmem:[#allocation3 + $0xa0] sm:$0xff]
        %v651 = vld [vmem:[#allocation3 + $0xa8] sm:$0xff]
        %v652 = vld [vmem:[#allocation3 + $0xb0] sm:$0xff]
        %v653 = vld [vmem:[#allocation3 + $0xb8] sm:$0xff]
        %v654 = vld [vmem:[#allocation3 + $0xc0] sm:$0xff]
        %v655 = vld [vmem:[#allocation3 + $0xc8] sm:$0xff]
        %v656 = vld [vmem:[#allocation3 + $0xd0] sm:$0xff]
        %v657 = vld [vmem:[#allocation3 + $0xd8] sm:$0xff]
        %v658 = vld [vmem:[#allocation3 + $0xe0] sm:$0xff]
        %v659 = vld [vmem:[#allocation3 + $0xe8] sm:$0xff]
        %v660 = vld [vmem:[#allocation3 + $0xf0] sm:$0xff]
        %v661 = vld [vmem:[#allocation3 + $0xf8] sm:$0xff]
        %v662 = vld [vmem:[#allocation3 + $0x100] sm:$0xff]
        %v663 = vld [vmem:[#allocation3 + $0x108] sm:$0xff]
        %v664 = vld [vmem:[#allocation3 + $0x110] sm:$0xff]
        %v665 = vld [vmem:[#allocation3 + $0x118] sm:$0xff]
        %v666 = vld [vmem:[#allocation3 + $0x120] sm:$0xff]
        %v667 = vld [vmem:[#allocation3 + $0x128] sm:$0xff]
        %v668 = vld [vmem:[#allocation3 + $0x130] sm:$0xff]
        %v669 = vld [vmem:[#allocation3 + $0x138] sm:$0xff]
        %v670 = vld [vmem:[#allocation3 + $0x140] sm:$0xff]
        %v671 = vld [vmem:[#allocation3 + $0x148] sm:$0xff]
        %v672 = vld [vmem:[#allocation3 + $0x150] sm:$0xff]
        %v673 = vld [vmem:[#allocation3 + $0x158] sm:$0xff]
        %v674 = vld [vmem:[#allocation3 + $0x160] sm:$0xff]
        %v675 = vld [vmem:[#allocation3 + $0x168] sm:$0xff]
        %v676 = vld [vmem:[#allocation3 + $0x170] sm:$0xff]
        %v677 = vld [vmem:[#allocation3 + $0x178] sm:$0xff]
        %v678 = vld [vmem:[%s2] sm:$0x1]
        %vm685 = vcmask 1040384
        %v686 = vrot.slane %v624, 7
        %v687 = vrot.slane %v625, 7
        %v688 = vsel %vm685, %v686, %v687
        %v689 = vrot.slane %v626, 7
        %v690 = vrot.slane %v627, 7
        %v691 = vsel %vm685, %v689, %v690
        %v692 = vrot.slane %v628, 7
        %v693 = vrot.slane %v629, 7
        %v694 = vsel %vm685, %v692, %v693
        %v704 = vsel %vm685, 0.0, %v686
        %v705 = vsel %vm685, 0.0, %v689
        %v706 = vsel %vm685, 0.0, %v692
        %v707 = vsel %vm685, %v687, 0.0
        %v708 = vsel %vm685, %v690, 0.0
        %v709 = vsel %vm685, %v693, 0.0
        %vm716 = vcmask 1046528
        %v717 = vrot.slane %v704, 1
        %v718 = vrot.slane %v688, 1
        %v719 = vsel %vm716, %v717, %v718
        %v720 = vrot.slane %v707, 1
        %v721 = vsel %vm716, %v718, %v720
        %v722 = vrot.slane %v705, 1
        %v723 = vrot.slane %v691, 1
        %v724 = vsel %vm716, %v722, %v723
        %v725 = vrot.slane %v708, 1
        %v726 = vsel %vm716, %v723, %v725
        %v727 = vrot.slane %v706, 1
        %v728 = vrot.slane %v694, 1
        %v729 = vsel %vm716, %v727, %v728
        %v730 = vrot.slane %v709, 1
        %v731 = vsel %vm716, %v728, %v730
        %vm738 = vcmask 1045504
        %v739 = vrot.slane %v704, 2
        %v740 = vrot.slane %v688, 2
        %v741 = vsel %vm738, %v739, %v740
        %v742 = vrot.slane %v707, 2
        %v743 = vsel %vm738, %v740, %v742
        %v744 = vrot.slane %v705, 2
        %v745 = vrot.slane %v691, 2
        %v746 = vsel %vm738, %v744, %v745
        %v747 = vrot.slane %v708, 2
        %v748 = vsel %vm738, %v745, %v747
        %v749 = vrot.slane %v706, 2
        %v750 = vrot.slane %v694, 2
        %v751 = vsel %vm738, %v749, %v750
        %v752 = vrot.slane %v709, 2
        %v753 = vsel %vm738, %v750, %v752
        %v761 = vperm.slane %v678, 0
        %763 = vmatpush.msra.mxu0 %v645
        %764 = vmatpush.msra.mxu0 %v644
        %765 = vmatpush.msra.mxu0 %v643
        %766 = vmatpush.msra.mxu0 %v642
        %767 = vmatpush.msra.mxu0 %v641
        %768 = vmatpush.msra.mxu0 %v640
        %769 = vmatpush.msra.mxu0 %v639
        %770 = vmatpush.msra.mxu0 %v638
        %771 = vmatpush.msra.mxu0 %v637
        %772 = vmatpush.msra.mxu0 %v636
        %773 = vmatpush.msra.mxu0 %v635
        %774 = vmatpush.msra.mxu0 %v634
        %775 = vmatpush.msra.mxu0 %v633
        %776 = vmatpush.msra.mxu0 %v632
        %777 = vmatpush.msra.mxu0 %v631
        %778 = vmatpush.msra.mxu0 %v630
        %779 = vmatmul.f32.gmra.mxu0 %v704
        %v780 = vpop.f32.mrf.mxu0
        %v781 = vadd.f32 %v761, %v780
        %782 = vmatmul.f32.gmra.mxu0 %v688
        %v783 = vpop.f32.mrf.mxu0
        %v784 = vadd.f32 %v761, %v783
        %785 = vmatmul.f32.gmra.mxu0 %v705
        %v786 = vpop.f32.mrf.mxu0
        %v787 = vadd.f32 %v761, %v786
        %788 = vmatmul.f32.gmra.mxu0 %v691
        %v789 = vpop.f32.mrf.mxu0
        %v790 = vadd.f32 %v761, %v789
        %791 = vmatmul.f32.gmra.mxu0 %v706
        %v792 = vpop.f32.mrf.mxu0
        %v793 = vadd.f32 %v761, %v792
        %794 = vmatmul.f32.gmra.mxu0 %v694
        %v795 = vpop.f32.mrf.mxu0
        %v796 = vadd.f32 %v761, %v795
        %797 = vdwg.mxu0
        %798 = vmatpush.msra.mxu0 %v661
        %799 = vmatpush.msra.mxu0 %v660
        %800 = vmatpush.msra.mxu0 %v659
        %801 = vmatpush.msra.mxu0 %v658
        %802 = vmatpush.msra.mxu0 %v657
        %803 = vmatpush.msra.mxu0 %v656
        %804 = vmatpush.msra.mxu0 %v655
        %805 = vmatpush.msra.mxu0 %v654
        %806 = vmatpush.msra.mxu0 %v653
        %807 = vmatpush.msra.mxu0 %v652
        %808 = vmatpush.msra.mxu0 %v651
        %809 = vmatpush.msra.mxu0 %v650
        %810 = vmatpush.msra.mxu0 %v649
        %811 = vmatpush.msra.mxu0 %v648
        %812 = vmatpush.msra.mxu0 %v647
        %813 = vmatpush.msra.mxu0 %v646
        %814 = vmatmul.f32.gmra.mxu0 %v719
        %v815 = vpop.f32.mrf.mxu0
        %v816 = vadd.f32 %v781, %v815
        %817 = vmatmul.f32.gmra.mxu0 %v721
        %v818 = vpop.f32.mrf.mxu0
        %v819 = vadd.f32 %v784, %v818
        %820 = vmatmul.f32.gmra.mxu0 %v724
        %v821 = vpop.f32.mrf.mxu0
        %v822 = vadd.f32 %v787, %v821
        %823 = vmatmul.f32.gmra.mxu0 %v726
        %v824 = vpop.f32.mrf.mxu0
        %v825 = vadd.f32 %v790, %v824
        %826 = vmatmul.f32.gmra.mxu0 %v729
        %v827 = vpop.f32.mrf.mxu0
        %v828 = vadd.f32 %v793, %v827
        %829 = vmatmul.f32.gmra.mxu0 %v731
        %v830 = vpop.f32.mrf.mxu0
        %v831 = vadd.f32 %v796, %v830
        %832 = vdwg.mxu0
        %833 = vmatpush.msra.mxu0 %v677
        %834 = vmatpush.msra.mxu0 %v676
        %835 = vmatpush.msra.mxu0 %v675
        %836 = vmatpush.msra.mxu0 %v674
        %837 = vmatpush.msra.mxu0 %v673
        %838 = vmatpush.msra.mxu0 %v672
        %839 = vmatpush.msra.mxu0 %v671
        %840 = vmatpush.msra.mxu0 %v670
        %841 = vmatpush.msra.mxu0 %v669
        %842 = vmatpush.msra.mxu0 %v668
        %843 = vmatpush.msra.mxu0 %v667
        %844 = vmatpush.msra.mxu0 %v666
        %845 = vmatpush.msra.mxu0 %v665
        %846 = vmatpush.msra.mxu0 %v664
        %847 = vmatpush.msra.mxu0 %v663
        %848 = vmatpush.msra.mxu0 %v662
        %849 = vmatmul.f32.gmra.mxu0 %v741
        %v850 = vpop.f32.mrf.mxu0
        %v851 = vadd.f32 %v816, %v850
        %852 = vmatmul.f32.gmra.mxu0 %v743
        %v853 = vpop.f32.mrf.mxu0
        %v854 = vadd.f32 %v819, %v853
        %855 = vmatmul.f32.gmra.mxu0 %v746
        %v856 = vpop.f32.mrf.mxu0
        %v857 = vadd.f32 %v822, %v856
        %858 = vmatmul.f32.gmra.mxu0 %v748
        %v859 = vpop.f32.mrf.mxu0
        %v860 = vadd.f32 %v825, %v859
        %861 = vmatmul.f32.gmra.mxu0 %v751
        %v862 = vpop.f32.mrf.mxu0
        %v863 = vadd.f32 %v828, %v862
        %864 = vmatmul.f32.gmra.mxu0 %v753
        %v865 = vpop.f32.mrf.mxu0
        %v866 = vadd.f32 %v831, %v865
        %867 = vdwg.mxu0
        %v868 = vmax.f32 %v851, 0.0
        %v869 = vmax.f32 %v854, 0.0
        %v870 = vmax.f32 %v857, 0.0
        %v871 = vmax.f32 %v860, 0.0
        %v872 = vmax.f32 %v863, 0.0
        %v873 = vmax.f32 %v866, 0.0
        %v874 = vld [vmem:[#allocation5] sm:$0xff]
        %v875 = vld [vmem:[#allocation5 + $0x8] sm:$0xff]
        %v876 = vld [vmem:[#allocation5 + $0x10] sm:$0xff]
        %v877 = vld [vmem:[#allocation5 + $0x18] sm:$0xff]
        %v878 = vld [vmem:[#allocation5 + $0x20] sm:$0xff]
        %v879 = vld [vmem:[#allocation5 + $0x28] sm:$0xff]
        %v880 = vld [vmem:[#allocation5 + $0x30] sm:$0xff]
        %v881 = vld [vmem:[#allocation5 + $0x38] sm:$0xff]
        %v882 = vld [vmem:[#allocation5 + $0x40] sm:$0xff]
        %v883 = vld [vmem:[#allocation5 + $0x48] sm:$0xff]
        %v884 = vld [vmem:[#allocation5 + $0x50] sm:$0xff]
        %v885 = vld [vmem:[#allocation5 + $0x58] sm:$0xff]
        %v886 = vld [vmem:[#allocation5 + $0x60] sm:$0xff]
        %v887 = vld [vmem:[#allocation5 + $0x68] sm:$0xff]
        %v888 = vld [vmem:[#allocation5 + $0x70] sm:$0xff]
        %v889 = vld [vmem:[#allocation5 + $0x78] sm:$0xff]
        %v890 = vld [vmem:[#allocation5 + $0x80] sm:$0xff]
        %v891 = vld [vmem:[#allocation5 + $0x88] sm:$0xff]
        %v892 = vld [vmem:[#allocation5 + $0x90] sm:$0xff]
        %v893 = vld [vmem:[#allocation5 + $0x98] sm:$0xff]
        %v894 = vld [vmem:[#allocation5 + $0xa0] sm:$0xff]
        %v895 = vld [vmem:[#allocation5 + $0xa8] sm:$0xff]
        %v896 = vld [vmem:[#allocation5 + $0xb0] sm:$0xff]
        %v897 = vld [vmem:[#allocation5 + $0xb8] sm:$0xff]
        %v898 = vld [vmem:[#allocation5 + $0xc0] sm:$0xff]
        %v899 = vld [vmem:[#allocation5 + $0xc8] sm:$0xff]
        %v900 = vld [vmem:[#allocation5 + $0xd0] sm:$0xff]
        %v901 = vld [vmem:[#allocation5 + $0xd8] sm:$0xff]
        %v902 = vld [vmem:[#allocation5 + $0xe0] sm:$0xff]
        %v903 = vld [vmem:[#allocation5 + $0xe8] sm:$0xff]
        %v904 = vld [vmem:[#allocation5 + $0xf0] sm:$0xff]
        %v905 = vld [vmem:[#allocation5 + $0xf8] sm:$0xff]
        %v906 = vld [vmem:[#allocation5 + $0x100] sm:$0xff]
        %v907 = vld [vmem:[#allocation5 + $0x108] sm:$0xff]
        %v908 = vld [vmem:[#allocation5 + $0x110] sm:$0xff]
        %v909 = vld [vmem:[#allocation5 + $0x118] sm:$0xff]
        %v910 = vld [vmem:[#allocation5 + $0x120] sm:$0xff]
        %v911 = vld [vmem:[#allocation5 + $0x128] sm:$0xff]
        %v912 = vld [vmem:[#allocation5 + $0x130] sm:$0xff]
        %v913 = vld [vmem:[#allocation5 + $0x138] sm:$0xff]
        %v914 = vld [vmem:[#allocation5 + $0x140] sm:$0xff]
        %v915 = vld [vmem:[#allocation5 + $0x148] sm:$0xff]
        %v916 = vld [vmem:[#allocation5 + $0x150] sm:$0xff]
        %v917 = vld [vmem:[#allocation5 + $0x158] sm:$0xff]
        %v918 = vld [vmem:[#allocation5 + $0x160] sm:$0xff]
        %v919 = vld [vmem:[#allocation5 + $0x168] sm:$0xff]
        %v920 = vld [vmem:[#allocation5 + $0x170] sm:$0xff]
        %v921 = vld [vmem:[#allocation5 + $0x178] sm:$0xff]
        %v922 = vld [vmem:[%s4] sm:$0x1]
        %v929 = vrot.slane %v868, 7
        %v930 = vrot.slane %v869, 7
        %v931 = vsel %vm685, %v929, %v930
        %v932 = vrot.slane %v870, 7
        %v933 = vrot.slane %v871, 7
        %v934 = vsel %vm685, %v932, %v933
        %v935 = vrot.slane %v872, 7
        %v936 = vrot.slane %v873, 7
        %v937 = vsel %vm685, %v935, %v936
        %v947 = vsel %vm685, 0.0, %v929
        %v948 = vsel %vm685, 0.0, %v932
        %v949 = vsel %vm685, 0.0, %v935
        %v950 = vsel %vm685, %v930, 0.0
        %v951 = vsel %vm685, %v933, 0.0
        %v952 = vsel %vm685, %v936, 0.0
        %v959 = vrot.slane %v947, 1
        %v960 = vrot.slane %v931, 1
        %v961 = vsel %vm716, %v959, %v960
        %v962 = vrot.slane %v950, 1
        %v963 = vsel %vm716, %v960, %v962
        %v964 = vrot.slane %v948, 1
        %v965 = vrot.slane %v934, 1
        %v966 = vsel %vm716, %v964, %v965
        %v967 = vrot.slane %v951, 1
        %v968 = vsel %vm716, %v965, %v967
        %v969 = vrot.slane %v949, 1
        %v970 = vrot.slane %v937, 1
        %v971 = vsel %vm716, %v969, %v970
        %v972 = vrot.slane %v952, 1
        %v973 = vsel %vm716, %v970, %v972
        %v980 = vrot.slane %v947, 2
        %v981 = vrot.slane %v931, 2
        %v982 = vsel %vm738, %v980, %v981
        %v983 = vrot.slane %v950, 2
        %v984 = vsel %vm738, %v981, %v983
        %v985 = vrot.slane %v948, 2
        %v986 = vrot.slane %v934, 2
        %v987 = vsel %vm738, %v985, %v986
        %v988 = vrot.slane %v951, 2
        %v989 = vsel %vm738, %v986, %v988
        %v990 = vrot.slane %v949, 2
        %v991 = vrot.slane %v937, 2
        %v992 = vsel %vm738, %v990, %v991
        %v993 = vrot.slane %v952, 2
        %v994 = vsel %vm738, %v991, %v993
        %v1002 = vperm.slane %v922, 0
        %1004 = vmatpush.msra.mxu0 %v889
        %1005 = vmatpush.msra.mxu0 %v888
        %1006 = vmatpush.msra.mxu0 %v887
        %1007 = vmatpush.msra.mxu0 %v886
        %1008 = vmatpush.msra.mxu0 %v885
        %1009 = vmatpush.msra.mxu0 %v884
        %1010 = vmatpush.msra.mxu0 %v883
        %1011 = vmatpush.msra.mxu0 %v882
        %1012 = vmatpush.msra.mxu0 %v881
        %1013 = vmatpush.msra.mxu0 %v880
        %1014 = vmatpush.msra.mxu0 %v879
        %1015 = vmatpush.msra.mxu0 %v878
        %1016 = vmatpush.msra.mxu0 %v877
        %1017 = vmatpush.msra.mxu0 %v876
        %1018 = vmatpush.msra.mxu0 %v875
        %1019 = vmatpush.msra.mxu0 %v874
        %1020 = vmatmul.f32.gmra.mxu0 %v947
        %v1021 = vpop.f32.mrf.mxu0
        %v1022 = vadd.f32 %v1002, %v1021
        %1023 = vmatmul.f32.gmra.mxu0 %v931
        %v1024 = vpop.f32.mrf.mxu0
        %v1025 = vadd.f32 %v1002, %v1024
        %1026 = vmatmul.f32.gmra.mxu0 %v948
        %v1027 = vpop.f32.mrf.mxu0
        %v1028 = vadd.f32 %v1002, %v1027
        %1029 = vmatmul.f32.gmra.mxu0 %v934
        %v1030 = vpop.f32.mrf.mxu0
        %v1031 = vadd.f32 %v1002, %v1030
        %1032 = vmatmul.f32.gmra.mxu0 %v949
        %v1033 = vpop.f32.mrf.mxu0
        %v1034 = vadd.f32 %v1002, %v1033
        %1035 = vmatmul.f32.gmra.mxu0 %v937
        %v1036 = vpop.f32.mrf.mxu0
        %v1037 = vadd.f32 %v1002, %v1036
        %1038 = vdwg.mxu0
        %1039 = vmatpush.msra.mxu0 %v905
        %1040 = vmatpush.msra.mxu0 %v904
        %1041 = vmatpush.msra.mxu0 %v903
        %1042 = vmatpush.msra.mxu0 %v902
        %1043 = vmatpush.msra.mxu0 %v901
        %1044 = vmatpush.msra.mxu0 %v900
        %1045 = vmatpush.msra.mxu0 %v899
        %1046 = vmatpush.msra.mxu0 %v898
        %1047 = vmatpush.msra.mxu0 %v897
        %1048 = vmatpush.msra.mxu0 %v896
        %1049 = vmatpush.msra.mxu0 %v895
        %1050 = vmatpush.msra.mxu0 %v894
        %1051 = vmatpush.msra.mxu0 %v893
        %1052 = vmatpush.msra.mxu0 %v892
        %1053 = vmatpush.msra.mxu0 %v891
        %1054 = vmatpush.msra.mxu0 %v890
        %1055 = vmatmul.f32.gmra.mxu0 %v961
        %v1056 = vpop.f32.mrf.mxu0
        %v1057 = vadd.f32 %v1022, %v1056
        %1058 = vmatmul.f32.gmra.mxu0 %v963
        %v1059 = vpop.f32.mrf.mxu0
        %v1060 = vadd.f32 %v1025, %v1059
        %1061 = vmatmul.f32.gmra.mxu0 %v966
        %v1062 = vpop.f32.mrf.mxu0
        %v1063 = vadd.f32 %v1028, %v1062
        %1064 = vmatmul.f32.gmra.mxu0 %v968
        %v1065 = vpop.f32.mrf.mxu0
        %v1066 = vadd.f32 %v1031, %v1065
        %1067 = vmatmul.f32.gmra.mxu0 %v971
        %v1068 = vpop.f32.mrf.mxu0
        %v1069 = vadd.f32 %v1034, %v1068
        %1070 = vmatmul.f32.gmra.mxu0 %v973
        %v1071 = vpop.f32.mrf.mxu0
        %v1072 = vadd.f32 %v1037, %v1071
        %1073 = vdwg.mxu0
        %1074 = vmatpush.msra.mxu0 %v921
        %1075 = vmatpush.msra.mxu0 %v920
        %1076 = vmatpush.msra.mxu0 %v919
        %1077 = vmatpush.msra.mxu0 %v918
        %1078 = vmatpush.msra.mxu0 %v917
        %1079 = vmatpush.msra.mxu0 %v916
        %1080 = vmatpush.msra.mxu0 %v915
        %1081 = vmatpush.msra.mxu0 %v914
        %1082 = vmatpush.msra.mxu0 %v913
        %1083 = vmatpush.msra.mxu0 %v912
        %1084 = vmatpush.msra.mxu0 %v911
        %1085 = vmatpush.msra.mxu0 %v910
        %1086 = vmatpush.msra.mxu0 %v909
        %1087 = vmatpush.msra.mxu0 %v908
        %1088 = vmatpush.msra.mxu0 %v907
        %1089 = vmatpush.msra.mxu0 %v906
        %1090 = vmatmul.f32.gmra.mxu0 %v982
        %v1091 = vpop.f32.mrf.mxu0
        %v1092 = vadd.f32 %v1057, %v1091
        %1093 = vmatmul.f32.gmra.mxu0 %v984
        %v1094 = vpop.f32.mrf.mxu0
        %v1095 = vadd.f32 %v1060, %v1094
        %1096 = vmatmul.f32.gmra.mxu0 %v987
        %v1097 = vpop.f32.mrf.mxu0
        %v1098 = vadd.f32 %v1063, %v1097
        %1099 = vmatmul.f32.gmra.mxu0 %v989
        %v1100 = vpop.f32.mrf.mxu0
        %v1101 = vadd.f32 %v1066, %v1100
        %1102 = vmatmul.f32.gmra.mxu0 %v992
        %v1103 = vpop.f32.mrf.mxu0
        %v1104 = vadd.f32 %v1069, %v1103
        %1105 = vmatmul.f32.gmra.mxu0 %v994
        %v1106 = vpop.f32.mrf.mxu0
        %v1107 = vadd.f32 %v1072, %v1106
        %1108 = vdwg.mxu0
        %v1109 = vmax.f32 %v1092, 0.0
        %v1110 = vmax.f32 %v1095, 0.0
        %v1111 = vmax.f32 %v1098, 0.0
        %v1112 = vmax.f32 %v1101, 0.0
        %v1113 = vmax.f32 %v1104, 0.0
        %v1114 = vmax.f32 %v1107, 0.0
        %v1115 = vld [vmem:[#allocation7] sm:$0xff]
        %v1116 = vld [vmem:[#allocation7 + $0x8] sm:$0xff]
        %v1117 = vld [vmem:[#allocation7 + $0x10] sm:$0xff]
        %v1118 = vld [vmem:[#allocation7 + $0x18] sm:$0xff]
        %v1119 = vld [vmem:[#allocation7 + $0x20] sm:$0xff]
        %v1120 = vld [vmem:[#allocation7 + $0x28] sm:$0xff]
        %v1121 = vld [vmem:[#allocation7 + $0x30] sm:$0xff]
        %v1122 = vld [vmem:[#allocation7 + $0x38] sm:$0xff]
        %v1123 = vld [vmem:[#allocation7 + $0x40] sm:$0xff]
        %v1124 = vld [vmem:[#allocation7 + $0x48] sm:$0xff]
        %v1125 = vld [vmem:[#allocation7 + $0x50] sm:$0xff]
        %v1126 = vld [vmem:[#allocation7 + $0x58] sm:$0xff]
        %v1127 = vld [vmem:[#allocation7 + $0x60] sm:$0xff]
        %v1128 = vld [vmem:[#allocation7 + $0x68] sm:$0xff]
        %v1129 = vld [vmem:[#allocation7 + $0x70] sm:$0xff]
        %v1130 = vld [vmem:[#allocation7 + $0x78] sm:$0xff]
        %v1131 = vld [vmem:[#allocation7 + $0x80] sm:$0xff]
        %v1132 = vld [vmem:[#allocation7 + $0x88] sm:$0xff]
        %v1133 = vld [vmem:[#allocation7 + $0x90] sm:$0xff]
        %v1134 = vld [vmem:[#allocation7 + $0x98] sm:$0xff]
        %v1135 = vld [vmem:[#allocation7 + $0xa0] sm:$0xff]
        %v1136 = vld [vmem:[#allocation7 + $0xa8] sm:$0xff]
        %v1137 = vld [vmem:[#allocation7 + $0xb0] sm:$0xff]
        %v1138 = vld [vmem:[#allocation7 + $0xb8] sm:$0xff]
        %v1139 = vld [vmem:[#allocation7 + $0xc0] sm:$0xff]
        %v1140 = vld [vmem:[#allocation7 + $0xc8] sm:$0xff]
        %v1141 = vld [vmem:[#allocation7 + $0xd0] sm:$0xff]
        %v1142 = vld [vmem:[#allocation7 + $0xd8] sm:$0xff]
        %v1143 = vld [vmem:[#allocation7 + $0xe0] sm:$0xff]
        %v1144 = vld [vmem:[#allocation7 + $0xe8] sm:$0xff]
        %v1145 = vld [vmem:[#allocation7 + $0xf0] sm:$0xff]
        %v1146 = vld [vmem:[#allocation7 + $0xf8] sm:$0xff]
        %v1147 = vld [vmem:[#allocation7 + $0x100] sm:$0xff]
        %v1148 = vld [vmem:[#allocation7 + $0x108] sm:$0xff]
        %v1149 = vld [vmem:[#allocation7 + $0x110] sm:$0xff]
        %v1150 = vld [vmem:[#allocation7 + $0x118] sm:$0xff]
        %v1151 = vld [vmem:[#allocation7 + $0x120] sm:$0xff]
        %v1152 = vld [vmem:[#allocation7 + $0x128] sm:$0xff]
        %v1153 = vld [vmem:[#allocation7 + $0x130] sm:$0xff]
        %v1154 = vld [vmem:[#allocation7 + $0x138] sm:$0xff]
        %v1155 = vld [vmem:[#allocation7 + $0x140] sm:$0xff]
        %v1156 = vld [vmem:[#allocation7 + $0x148] sm:$0xff]
        %v1157 = vld [vmem:[#allocation7 + $0x150] sm:$0xff]
        %v1158 = vld [vmem:[#allocation7 + $0x158] sm:$0xff]
        %v1159 = vld [vmem:[#allocation7 + $0x160] sm:$0xff]
        %v1160 = vld [vmem:[#allocation7 + $0x168] sm:$0xff]
        %v1161 = vld [vmem:[#allocation7 + $0x170] sm:$0xff]
        %v1162 = vld [vmem:[#allocation7 + $0x178] sm:$0xff]
        %v1163 = vld [vmem:[%s6] sm:$0x1]
        %v1170 = vrot.slane %v1109, 7
        %v1171 = vrot.slane %v1110, 7
        %v1172 = vsel %vm685, %v1170, %v1171
        %v1173 = vrot.slane %v1111, 7
        %v1174 = vrot.slane %v1112, 7
        %v1175 = vsel %vm685, %v1173, %v1174
        %v1176 = vrot.slane %v1113, 7
        %v1177 = vrot.slane %v1114, 7
        %v1178 = vsel %vm685, %v1176, %v1177
        %v1188 = vsel %vm685, 0.0, %v1170
        %v1189 = vsel %vm685, 0.0, %v1173
        %v1190 = vsel %vm685, 0.0, %v1176
        %v1191 = vsel %vm685, %v1171, 0.0
        %v1192 = vsel %vm685, %v1174, 0.0
        %v1193 = vsel %vm685, %v1177, 0.0
        %v1200 = vrot.slane %v1188, 1
        %v1201 = vrot.slane %v1172, 1
        %v1202 = vsel %vm716, %v1200, %v1201
        %v1203 = vrot.slane %v1191, 1
        %v1204 = vsel %vm716, %v1201, %v1203
        %v1205 = vrot.slane %v1189, 1
        %v1206 = vrot.slane %v1175, 1
        %v1207 = vsel %vm716, %v1205, %v1206
        %v1208 = vrot.slane %v1192, 1
        %v1209 = vsel %vm716, %v1206, %v1208
        %v1210 = vrot.slane %v1190, 1
        %v1211 = vrot.slane %v1178, 1
        %v1212 = vsel %vm716, %v1210, %v1211
        %v1213 = vrot.slane %v1193, 1
        %v1214 = vsel %vm716, %v1211, %v1213
        %v1221 = vrot.slane %v1188, 2
        %v1222 = vrot.slane %v1172, 2
        %v1223 = vsel %vm738, %v1221, %v1222
        %v1224 = vrot.slane %v1191, 2
        %v1225 = vsel %vm738, %v1222, %v1224
        %v1226 = vrot.slane %v1189, 2
        %v1227 = vrot.slane %v1175, 2
        %v1228 = vsel %vm738, %v1226, %v1227
        %v1229 = vrot.slane %v1192, 2
        %v1230 = vsel %vm738, %v1227, %v1229
        %v1231 = vrot.slane %v1190, 2
        %v1232 = vrot.slane %v1178, 2
        %v1233 = vsel %vm738, %v1231, %v1232
        %v1234 = vrot.slane %v1193, 2
        %v1235 = vsel %vm738, %v1232, %v1234
        %v1243 = vperm.slane %v1163, 0
        %1245 = vmatpush.msra.mxu0 %v1130
        %1246 = vmatpush.msra.mxu0 %v1129
        %1247 = vmatpush.msra.mxu0 %v1128
        %1248 = vmatpush.msra.mxu0 %v1127
        %1249 = vmatpush.msra.mxu0 %v1126
        %1250 = vmatpush.msra.mxu0 %v1125
        %1251 = vmatpush.msra.mxu0 %v1124
        %1252 = vmatpush.msra.mxu0 %v1123
        %1253 = vmatpush.msra.mxu0 %v1122
        %1254 = vmatpush.msra.mxu0 %v1121
        %1255 = vmatpush.msra.mxu0 %v1120
        %1256 = vmatpush.msra.mxu0 %v1119
        %1257 = vmatpush.msra.mxu0 %v1118
        %1258 = vmatpush.msra.mxu0 %v1117
        %1259 = vmatpush.msra.mxu0 %v1116
        %1260 = vmatpush.msra.mxu0 %v1115
        %1261 = vmatmul.f32.gmra.mxu0 %v1188
        %v1262 = vpop.f32.mrf.mxu0
        %v1263 = vadd.f32 %v1243, %v1262
        %1264 = vmatmul.f32.gmra.mxu0 %v1172
        %v1265 = vpop.f32.mrf.mxu0
        %v1266 = vadd.f32 %v1243, %v1265
        %1267 = vmatmul.f32.gmra.mxu0 %v1189
        %v1268 = vpop.f32.mrf.mxu0
        %v1269 = vadd.f32 %v1243, %v1268
        %1270 = vmatmul.f32.gmra.mxu0 %v1175
        %v1271 = vpop.f32.mrf.mxu0
        %v1272 = vadd.f32 %v1243, %v1271
        %1273 = vmatmul.f32.gmra.mxu0 %v1190
        %v1274 = vpop.f32.mrf.mxu0
        %v1275 = vadd.f32 %v1243, %v1274
        %1276 = vmatmul.f32.gmra.mxu0 %v1178
        %v1277 = vpop.f32.mrf.mxu0
        %v1278 = vadd.f32 %v1243, %v1277
        %1279 = vdwg.mxu0
        %1280 = vmatpush.msra.mxu0 %v1146
        %1281 = vmatpush.msra.mxu0 %v1145
        %1282 = vmatpush.msra.mxu0 %v1144
        %1283 = vmatpush.msra.mxu0 %v1143
        %1284 = vmatpush.msra.mxu0 %v1142
        %1285 = vmatpush.msra.mxu0 %v1141
        %1286 = vmatpush.msra.mxu0 %v1140
        %1287 = vmatpush.msra.mxu0 %v1139
        %1288 = vmatpush.msra.mxu0 %v1138
        %1289 = vmatpush.msra.mxu0 %v1137
        %1290 = vmatpush.msra.mxu0 %v1136
        %1291 = vmatpush.msra.mxu0 %v1135
        %1292 = vmatpush.msra.mxu0 %v1134
        %1293 = vmatpush.msra.mxu0 %v1133
        %1294 = vmatpush.msra.mxu0 %v1132
        %1295 = vmatpush.msra.mxu0 %v1131
        %1296 = vmatmul.f32.gmra.mxu0 %v1202
        %v1297 = vpop.f32.mrf.mxu0
        %v1298 = vadd.f32 %v1263, %v1297
        %1299 = vmatmul.f32.gmra.mxu0 %v1204
        %v1300 = vpop.f32.mrf.mxu0
        %v1301 = vadd.f32 %v1266, %v1300
        %1302 = vmatmul.f32.gmra.mxu0 %v1207
        %v1303 = vpop.f32.mrf.mxu0
        %v1304 = vadd.f32 %v1269, %v1303
        %1305 = vmatmul.f32.gmra.mxu0 %v1209
        %v1306 = vpop.f32.mrf.mxu0
        %v1307 = vadd.f32 %v1272, %v1306
        %1308 = vmatmul.f32.gmra.mxu0 %v1212
        %v1309 = vpop.f32.mrf.mxu0
        %v1310 = vadd.f32 %v1275, %v1309
        %1311 = vmatmul.f32.gmra.mxu0 %v1214
        %v1312 = vpop.f32.mrf.mxu0
        %v1313 = vadd.f32 %v1278, %v1312
        %1314 = vdwg.mxu0
        %1315 = vmatpush.msra.mxu0 %v1162
        %1316 = vmatpush.msra.mxu0 %v1161
        %1317 = vmatpush.msra.mxu0 %v1160
        %1318 = vmatpush.msra.mxu0 %v1159
        %1319 = vmatpush.msra.mxu0 %v1158
        %1320 = vmatpush.msra.mxu0 %v1157
        %1321 = vmatpush.msra.mxu0 %v1156
        %1322 = vmatpush.msra.mxu0 %v1155
        %1323 = vmatpush.msra.mxu0 %v1154
        %1324 = vmatpush.msra.mxu0 %v1153
        %1325 = vmatpush.msra.mxu0 %v1152
        %1326 = vmatpush.msra.mxu0 %v1151
        %1327 = vmatpush.msra.mxu0 %v1150
        %1328 = vmatpush.msra.mxu0 %v1149
        %1329 = vmatpush.msra.mxu0 %v1148
        %1330 = vmatpush.msra.mxu0 %v1147
        %1331 = vmatmul.f32.gmra.mxu0 %v1223
        %v1332 = vpop.f32.mrf.mxu0
        %v1333 = vadd.f32 %v1298, %v1332
        %1334 = vmatmul.f32.gmra.mxu0 %v1225
        %v1335 = vpop.f32.mrf.mxu0
        %v1336 = vadd.f32 %v1301, %v1335
        %1337 = vmatmul.f32.gmra.mxu0 %v1228
        %v1338 = vpop.f32.mrf.mxu0
        %v1339 = vadd.f32 %v1304, %v1338
        %1340 = vmatmul.f32.gmra.mxu0 %v1230
        %v1341 = vpop.f32.mrf.mxu0
        %v1342 = vadd.f32 %v1307, %v1341
        %1343 = vmatmul.f32.gmra.mxu0 %v1233
        %v1344 = vpop.f32.mrf.mxu0
        %v1345 = vadd.f32 %v1310, %v1344
        %1346 = vmatmul.f32.gmra.mxu0 %v1235
        %v1347 = vpop.f32.mrf.mxu0
        %v1348 = vadd.f32 %v1313, %v1347
        %1349 = vdwg.mxu0
        %v1350 = vmax.f32 %v1333, 0.0
        %v1351 = vmax.f32 %v1336, 0.0
        %v1352 = vmax.f32 %v1339, 0.0
        %v1353 = vmax.f32 %v1342, 0.0
        %v1354 = vmax.f32 %v1345, 0.0
        %v1355 = vmax.f32 %v1348, 0.0
        %v1356 = vld [vmem:[#allocation8] sm:$0xff]
        %v1357 = vld [vmem:[#allocation8 + $0x8] sm:$0xff]
        %v1358 = vld [vmem:[#allocation8 + $0x10] sm:$0xff]
        %v1359 = vld [vmem:[#allocation8 + $0x18] sm:$0xff]
        %v1360 = vld [vmem:[#allocation8 + $0x20] sm:$0xff]
        %v1361 = vld [vmem:[#allocation8 + $0x28] sm:$0xff]
        %v1362 = vld [vmem:[#allocation8 + $0x30] sm:$0xff]
        %v1363 = vld [vmem:[#allocation8 + $0x38] sm:$0xff]
        %v1364 = vld [vmem:[#allocation8 + $0x40] sm:$0xff]
        %v1365 = vld [vmem:[#allocation8 + $0x48] sm:$0xff]
        %v1366 = vld [vmem:[#allocation8 + $0x50] sm:$0xff]
        %v1367 = vld [vmem:[#allocation8 + $0x58] sm:$0xff]
        %v1368 = vld [vmem:[#allocation8 + $0x60] sm:$0xff]
        %v1369 = vld [vmem:[#allocation8 + $0x68] sm:$0xff]
        %v1370 = vld [vmem:[#allocation8 + $0x70] sm:$0xff]
        %v1371 = vld [vmem:[#allocation8 + $0x78] sm:$0xff]
        %v1372 = vld [vmem:[#allocation8 + $0x80] sm:$0xff]
        %v1373 = vld [vmem:[#allocation8 + $0x88] sm:$0xff]
        %v1374 = vld [vmem:[#allocation8 + $0x90] sm:$0xff]
        %v1375 = vld [vmem:[#allocation8 + $0x98] sm:$0xff]
        %v1376 = vld [vmem:[#allocation8 + $0xa0] sm:$0xff]
        %v1377 = vld [vmem:[#allocation8 + $0xa8] sm:$0xff]
        %v1378 = vld [vmem:[#allocation8 + $0xb0] sm:$0xff]
        %v1379 = vld [vmem:[#allocation8 + $0xb8] sm:$0xff]
        %v1380 = vld [vmem:[#allocation8 + $0xc0] sm:$0xff]
        %v1381 = vld [vmem:[#allocation8 + $0xc8] sm:$0xff]
        %v1382 = vld [vmem:[#allocation8 + $0xd0] sm:$0xff]
        %v1383 = vld [vmem:[#allocation8 + $0xd8] sm:$0xff]
        %v1384 = vld [vmem:[#allocation8 + $0xe0] sm:$0xff]
        %v1385 = vld [vmem:[#allocation8 + $0xe8] sm:$0xff]
        %v1386 = vld [vmem:[#allocation8 + $0xf0] sm:$0xff]
        %v1387 = vld [vmem:[#allocation8 + $0xf8] sm:$0xff]
        %v1388 = vld [vmem:[#allocation8 + $0x100] sm:$0xff]
        %v1389 = vld [vmem:[#allocation8 + $0x108] sm:$0xff]
        %v1390 = vld [vmem:[#allocation8 + $0x110] sm:$0xff]
        %v1391 = vld [vmem:[#allocation8 + $0x118] sm:$0xff]
        %v1392 = vld [vmem:[#allocation8 + $0x120] sm:$0xff]
        %v1393 = vld [vmem:[#allocation8 + $0x128] sm:$0xff]
        %v1394 = vld [vmem:[#allocation8 + $0x130] sm:$0xff]
        %v1395 = vld [vmem:[#allocation8 + $0x138] sm:$0xff]
        %v1396 = vld [vmem:[#allocation8 + $0x140] sm:$0xff]
        %v1397 = vld [vmem:[#allocation8 + $0x148] sm:$0xff]
        %v1398 = vld [vmem:[#allocation8 + $0x150] sm:$0xff]
        %v1399 = vld [vmem:[#allocation8 + $0x158] sm:$0xff]
        %v1400 = vld [vmem:[#allocation8 + $0x160] sm:$0xff]
        %v1401 = vld [vmem:[#allocation8 + $0x168] sm:$0xff]
        %v1402 = vld [vmem:[#allocation8 + $0x170] sm:$0xff]
        %v1403 = vld [vmem:[#allocation8 + $0x178] sm:$0xff]
        %v1404 = vld [vmem:[%s8] sm:$0x1]
        %v1411 = vrot.slane %v1350, 7
        %v1412 = vrot.slane %v1351, 7
        %v1413 = vsel %vm685, %v1411, %v1412
        %v1414 = vrot.slane %v1352, 7
        %v1415 = vrot.slane %v1353, 7
        %v1416 = vsel %vm685, %v1414, %v1415
        %v1417 = vrot.slane %v1354, 7
        %v1418 = vrot.slane %v1355, 7
        %v1419 = vsel %vm685, %v1417, %v1418
        %v1429 = vsel %vm685, 0.0, %v1411
        %v1430 = vsel %vm685, 0.0, %v1414
        %v1431 = vsel %vm685, 0.0, %v1417
        %v1432 = vsel %vm685, %v1412, 0.0
        %v1433 = vsel %vm685, %v1415, 0.0
        %v1434 = vsel %vm685, %v1418, 0.0
        %v1441 = vrot.slane %v1429, 1
        %v1442 = vrot.slane %v1413, 1
        %v1443 = vsel %vm716, %v1441, %v1442
        %v1444 = vrot.slane %v1432, 1
        %v1445 = vsel %vm716, %v1442, %v1444
        %v1446 = vrot.slane %v1430, 1
        %v1447 = vrot.slane %v1416, 1
        %v1448 = vsel %vm716, %v1446, %v1447
        %v1449 = vrot.slane %v1433, 1
        %v1450 = vsel %vm716, %v1447, %v1449
        %v1451 = vrot.slane %v1431, 1
        %v1452 = vrot.slane %v1419, 1
        %v1453 = vsel %vm716, %v1451, %v1452
        %v1454 = vrot.slane %v1434, 1
        %v1455 = vsel %vm716, %v1452, %v1454
        %v1462 = vrot.slane %v1429, 2
        %v1463 = vrot.slane %v1413, 2
        %v1464 = vsel %vm738, %v1462, %v1463
        %v1465 = vrot.slane %v1432, 2
        %v1466 = vsel %vm738, %v1463, %v1465
        %v1467 = vrot.slane %v1430, 2
        %v1468 = vrot.slane %v1416, 2
        %v1469 = vsel %vm738, %v1467, %v1468
        %v1470 = vrot.slane %v1433, 2
        %v1471 = vsel %vm738, %v1468, %v1470
        %v1472 = vrot.slane %v1431, 2
        %v1473 = vrot.slane %v1419, 2
        %v1474 = vsel %vm738, %v1472, %v1473
        %v1475 = vrot.slane %v1434, 2
        %v1476 = vsel %vm738, %v1473, %v1475
        %v1484 = vperm.slane %v1404, 0
        %1486 = vmatpush.msra.mxu0 %v1371
        %1487 = vmatpush.msra.mxu0 %v1370
        %1488 = vmatpush.msra.mxu0 %v1369
        %1489 = vmatpush.msra.mxu0 %v1368
        %1490 = vmatpush.msra.mxu0 %v1367
        %1491 = vmatpush.msra.mxu0 %v1366
        %1492 = vmatpush.msra.mxu0 %v1365
        %1493 = vmatpush.msra.mxu0 %v1364
        %1494 = vmatpush.msra.mxu0 %v1363
        %1495 = vmatpush.msra.mxu0 %v1362
        %1496 = vmatpush.msra.mxu0 %v1361
        %1497 = vmatpush.msra.mxu0 %v1360
        %1498 = vmatpush.msra.mxu0 %v1359
        %1499 = vmatpush.msra.mxu0 %v1358
        %1500 = vmatpush.msra.mxu0 %v1357
        %1501 = vmatpush.msra.mxu0 %v1356
        %1502 = vmatmul.f32.gmra.mxu0 %v1429
        %v1503 = vpop.f32.mrf.mxu0
        %v1504 = vadd.f32 %v1484, %v1503
        %1505 = vmatmul.f32.gmra.mxu0 %v1413
        %v1506 = vpop.f32.mrf.mxu0
        %v1507 = vadd.f32 %v1484, %v1506
        %1508 = vmatmul.f32.gmra.mxu0 %v1430
        %v1509 = vpop.f32.mrf.mxu0
        %v1510 = vadd.f32 %v1484, %v1509
        %1511 = vmatmul.f32.gmra.mxu0 %v1416
        %v1512 = vpop.f32.mrf.mxu0
        %v1513 = vadd.f32 %v1484, %v1512
        %1514 = vmatmul.f32.gmra.mxu0 %v1431
        %v1515 = vpop.f32.mrf.mxu0
        %v1516 = vadd.f32 %v1484, %v1515
        %1517 = vmatmul.f32.gmra.mxu0 %v1419
        %v1518 = vpop.f32.mrf.mxu0
        %v1519 = vadd.f32 %v1484, %v1518
        %1520 = vdwg.mxu0
        %1521 = vmatpush.msra.mxu0 %v1387
        %1522 = vmatpush.msra.mxu0 %v1386
        %1523 = vmatpush.msra.mxu0 %v1385
        %1524 = vmatpush.msra.mxu0 %v1384
        %1525 = vmatpush.msra.mxu0 %v1383
        %1526 = vmatpush.msra.mxu0 %v1382
        %1527 = vmatpush.msra.mxu0 %v1381
        %1528 = vmatpush.msra.mxu0 %v1380
        %1529 = vmatpush.msra.mxu0 %v1379
        %1530 = vmatpush.msra.mxu0 %v1378
        %1531 = vmatpush.msra.mxu0 %v1377
        %1532 = vmatpush.msra.mxu0 %v1376
        %1533 = vmatpush.msra.mxu0 %v1375
        %1534 = vmatpush.msra.mxu0 %v1374
        %1535 = vmatpush.msra.mxu0 %v1373
        %1536 = vmatpush.msra.mxu0 %v1372
        %1537 = vmatmul.f32.gmra.mxu0 %v1443
        %v1538 = vpop.f32.mrf.mxu0
        %v1539 = vadd.f32 %v1504, %v1538
        %1540 = vmatmul.f32.gmra.mxu0 %v1445
        %v1541 = vpop.f32.mrf.mxu0
        %v1542 = vadd.f32 %v1507, %v1541
        %1543 = vmatmul.f32.gmra.mxu0 %v1448
        %v1544 = vpop.f32.mrf.mxu0
        %v1545 = vadd.f32 %v1510, %v1544
        %1546 = vmatmul.f32.gmra.mxu0 %v1450
        %v1547 = vpop.f32.mrf.mxu0
        %v1548 = vadd.f32 %v1513, %v1547
        %1549 = vmatmul.f32.gmra.mxu0 %v1453
        %v1550 = vpop.f32.mrf.mxu0
        %v1551 = vadd.f32 %v1516, %v1550
        %1552 = vmatmul.f32.gmra.mxu0 %v1455
        %v1553 = vpop.f32.mrf.mxu0
        %v1554 = vadd.f32 %v1519, %v1553
        %1555 = vdwg.mxu0
        %1556 = vmatpush.msra.mxu0 %v1403
        %1557 = vmatpush.msra.mxu0 %v1402
        %1558 = vmatpush.msra.mxu0 %v1401
        %1559 = vmatpush.msra.mxu0 %v1400
        %1560 = vmatpush.msra.mxu0 %v1399
        %1561 = vmatpush.msra.mxu0 %v1398
        %1562 = vmatpush.msra.mxu0 %v1397
        %1563 = vmatpush.msra.mxu0 %v1396
        %1564 = vmatpush.msra.mxu0 %v1395
        %1565 = vmatpush.msra.mxu0 %v1394
        %1566 = vmatpush.msra.mxu0 %v1393
        %1567 = vmatpush.msra.mxu0 %v1392
        %1568 = vmatpush.msra.mxu0 %v1391
        %1569 = vmatpush.msra.mxu0 %v1390
        %1570 = vmatpush.msra.mxu0 %v1389
        %1571 = vmatpush.msra.mxu0 %v1388
        %1572 = vmatmul.f32.gmra.mxu0 %v1464
        %v1573 = vpop.f32.mrf.mxu0
        %v1574 = vadd.f32 %v1539, %v1573
        %1575 = vmatmul.f32.gmra.mxu0 %v1466
        %v1576 = vpop.f32.mrf.mxu0
        %v1577 = vadd.f32 %v1542, %v1576
        %1578 = vmatmul.f32.gmra.mxu0 %v1469
        %v1579 = vpop.f32.mrf.mxu0
        %v1580 = vadd.f32 %v1545, %v1579
        %1581 = vmatmul.f32.gmra.mxu0 %v1471
        %v1582 = vpop.f32.mrf.mxu0
        %v1583 = vadd.f32 %v1548, %v1582
        %1584 = vmatmul.f32.gmra.mxu0 %v1474
        %v1585 = vpop.f32.mrf.mxu0
        %v1586 = vadd.f32 %v1551, %v1585
        %1587 = vmatmul.f32.gmra.mxu0 %v1476
        %v1588 = vpop.f32.mrf.mxu0
        %v1589 = vadd.f32 %v1554, %v1588
        %1590 = vdwg.mxu0
        %v1591 = vmax.f32 %v1574, 0.0
        %v1592 = vmax.f32 %v1577, 0.0
        %v1593 = vmax.f32 %v1580, 0.0
        %v1594 = vmax.f32 %v1583, 0.0
        %v1595 = vmax.f32 %v1586, 0.0
        %v1596 = vmax.f32 %v1589, 0.0
        %v1597 = vld [vmem:[#allocation10] sm:$0xff]
        %v1598 = vld [vmem:[#allocation10 + $0x8] sm:$0xff]
        %v1599 = vld [vmem:[#allocation10 + $0x10] sm:$0xff]
        %v1600 = vld [vmem:[#allocation10 + $0x18] sm:$0xff]
        %v1601 = vld [vmem:[#allocation10 + $0x20] sm:$0xff]
        %v1602 = vld [vmem:[#allocation10 + $0x28] sm:$0xff]
        %v1603 = vld [vmem:[#allocation10 + $0x30] sm:$0xff]
        %v1604 = vld [vmem:[#allocation10 + $0x38] sm:$0xff]
        %v1605 = vld [vmem:[#allocation10 + $0x40] sm:$0xff]
        %v1606 = vld [vmem:[#allocation10 + $0x48] sm:$0xff]
        %v1607 = vld [vmem:[#allocation10 + $0x50] sm:$0xff]
        %v1608 = vld [vmem:[#allocation10 + $0x58] sm:$0xff]
        %v1609 = vld [vmem:[#allocation10 + $0x60] sm:$0xff]
        %v1610 = vld [vmem:[#allocation10 + $0x68] sm:$0xff]
        %v1611 = vld [vmem:[#allocation10 + $0x70] sm:$0xff]
        %v1612 = vld [vmem:[#allocation10 + $0x78] sm:$0xff]
        %v1613 = vld [vmem:[#allocation10 + $0x80] sm:$0xff]
        %v1614 = vld [vmem:[#allocation10 + $0x88] sm:$0xff]
        %v1615 = vld [vmem:[#allocation10 + $0x90] sm:$0xff]
        %v1616 = vld [vmem:[#allocation10 + $0x98] sm:$0xff]
        %v1617 = vld [vmem:[#allocation10 + $0xa0] sm:$0xff]
        %v1618 = vld [vmem:[#allocation10 + $0xa8] sm:$0xff]
        %v1619 = vld [vmem:[#allocation10 + $0xb0] sm:$0xff]
        %v1620 = vld [vmem:[#allocation10 + $0xb8] sm:$0xff]
        %v1621 = vld [vmem:[#allocation10 + $0xc0] sm:$0xff]
        %v1622 = vld [vmem:[#allocation10 + $0xc8] sm:$0xff]
        %v1623 = vld [vmem:[#allocation10 + $0xd0] sm:$0xff]
        %v1624 = vld [vmem:[#allocation10 + $0xd8] sm:$0xff]
        %v1625 = vld [vmem:[#allocation10 + $0xe0] sm:$0xff]
        %v1626 = vld [vmem:[#allocation10 + $0xe8] sm:$0xff]
        %v1627 = vld [vmem:[#allocation10 + $0xf0] sm:$0xff]
        %v1628 = vld [vmem:[#allocation10 + $0xf8] sm:$0xff]
        %v1629 = vld [vmem:[#allocation10 + $0x100] sm:$0xff]
        %v1630 = vld [vmem:[#allocation10 + $0x108] sm:$0xff]
        %v1631 = vld [vmem:[#allocation10 + $0x110] sm:$0xff]
        %v1632 = vld [vmem:[#allocation10 + $0x118] sm:$0xff]
        %v1633 = vld [vmem:[#allocation10 + $0x120] sm:$0xff]
        %v1634 = vld [vmem:[#allocation10 + $0x128] sm:$0xff]
        %v1635 = vld [vmem:[#allocation10 + $0x130] sm:$0xff]
        %v1636 = vld [vmem:[#allocation10 + $0x138] sm:$0xff]
        %v1637 = vld [vmem:[#allocation10 + $0x140] sm:$0xff]
        %v1638 = vld [vmem:[#allocation10 + $0x148] sm:$0xff]
        %v1639 = vld [vmem:[#allocation10 + $0x150] sm:$0xff]
        %v1640 = vld [vmem:[#allocation10 + $0x158] sm:$0xff]
        %v1641 = vld [vmem:[#allocation10 + $0x160] sm:$0xff]
        %v1642 = vld [vmem:[#allocation10 + $0x168] sm:$0xff]
        %v1643 = vld [vmem:[#allocation10 + $0x170] sm:$0xff]
        %v1644 = vld [vmem:[#allocation10 + $0x178] sm:$0xff]
        %v1645 = vld [vmem:[%s10] sm:$0x1]
        %v1652 = vrot.slane %v1591, 7
        %v1653 = vrot.slane %v1592, 7
        %v1654 = vsel %vm685, %v1652, %v1653
        %v1655 = vrot.slane %v1593, 7
        %v1656 = vrot.slane %v1594, 7
        %v1657 = vsel %vm685, %v1655, %v1656
        %v1658 = vrot.slane %v1595, 7
        %v1659 = vrot.slane %v1596, 7
        %v1660 = vsel %vm685, %v1658, %v1659
        %v1670 = vsel %vm685, 0.0, %v1652
        %v1671 = vsel %vm685, 0.0, %v1655
        %v1672 = vsel %vm685, 0.0, %v1658
        %v1673 = vsel %vm685, %v1653, 0.0
        %v1674 = vsel %vm685, %v1656, 0.0
        %v1675 = vsel %vm685, %v1659, 0.0
        %v1682 = vrot.slane %v1670, 1
        %v1683 = vrot.slane %v1654, 1
        %v1684 = vsel %vm716, %v1682, %v1683
        %v1685 = vrot.slane %v1673, 1
        %v1686 = vsel %vm716, %v1683, %v1685
        %v1687 = vrot.slane %v1671, 1
        %v1688 = vrot.slane %v1657, 1
        %v1689 = vsel %vm716, %v1687, %v1688
        %v1690 = vrot.slane %v1674, 1
        %v1691 = vsel %vm716, %v1688, %v1690
        %v1692 = vrot.slane %v1672, 1
        %v1693 = vrot.slane %v1660, 1
        %v1694 = vsel %vm716, %v1692, %v1693
        %v1695 = vrot.slane %v1675, 1
        %v1696 = vsel %vm716, %v1693, %v1695
        %v1703 = vrot.slane %v1670, 2
        %v1704 = vrot.slane %v1654, 2
        %v1705 = vsel %vm738, %v1703, %v1704
        %v1706 = vrot.slane %v1673, 2
        %v1707 = vsel %vm738, %v1704, %v1706
        %v1708 = vrot.slane %v1671, 2
        %v1709 = vrot.slane %v1657, 2
        %v1710 = vsel %vm738, %v1708, %v1709
        %v1711 = vrot.slane %v1674, 2
        %v1712 = vsel %vm738, %v1709, %v1711
        %v1713 = vrot.slane %v1672, 2
        %v1714 = vrot.slane %v1660, 2
        %v1715 = vsel %vm738, %v1713, %v1714
        %v1716 = vrot.slane %v1675, 2
        %v1717 = vsel %vm738, %v1714, %v1716
        %v1725 = vperm.slane %v1645, 0
        %1727 = vmatpush.msra.mxu0 %v1612
        %1728 = vmatpush.msra.mxu0 %v1611
        %1729 = vmatpush.msra.mxu0 %v1610
        %1730 = vmatpush.msra.mxu0 %v1609
        %1731 = vmatpush.msra.mxu0 %v1608
        %1732 = vmatpush.msra.mxu0 %v1607
        %1733 = vmatpush.msra.mxu0 %v1606
        %1734 = vmatpush.msra.mxu0 %v1605
        %1735 = vmatpush.msra.mxu0 %v1604
        %1736 = vmatpush.msra.mxu0 %v1603
        %1737 = vmatpush.msra.mxu0 %v1602
        %1738 = vmatpush.msra.mxu0 %v1601
        %1739 = vmatpush.msra.mxu0 %v1600
        %1740 = vmatpush.msra.mxu0 %v1599
        %1741 = vmatpush.msra.mxu0 %v1598
        %1742 = vmatpush.msra.mxu0 %v1597
        %1743 = vmatmul.f32.gmra.mxu0 %v1670
        %v1744 = vpop.f32.mrf.mxu0
        %v1745 = vadd.f32 %v1725, %v1744
        %1746 = vmatmul.f32.gmra.mxu0 %v1654
        %v1747 = vpop.f32.mrf.mxu0
        %v1748 = vadd.f32 %v1725, %v1747
        %1749 = vmatmul.f32.gmra.mxu0 %v1671
        %v1750 = vpop.f32.mrf.mxu0
        %v1751 = vadd.f32 %v1725, %v1750
        %1752 = vmatmul.f32.gmra.mxu0 %v1657
        %v1753 = vpop.f32.mrf.mxu0
        %v1754 = vadd.f32 %v1725, %v1753
        %1755 = vmatmul.f32.gmra.mxu0 %v1672
        %v1756 = vpop.f32.mrf.mxu0
        %v1757 = vadd.f32 %v1725, %v1756
        %1758 = vmatmul.f32.gmra.mxu0 %v1660
        %v1759 = vpop.f32.mrf.mxu0
        %v1760 = vadd.f32 %v1725, %v1759
        %1761 = vdwg.mxu0
        %1762 = vmatpush.msra.mxu0 %v1628
        %1763 = vmatpush.msra.mxu0 %v1627
        %1764 = vmatpush.msra.mxu0 %v1626
        %1765 = vmatpush.msra.mxu0 %v1625
        %1766 = vmatpush.msra.mxu0 %v1624
        %1767 = vmatpush.msra.mxu0 %v1623
        %1768 = vmatpush.msra.mxu0 %v1622
        %1769 = vmatpush.msra.mxu0 %v1621
        %1770 = vmatpush.msra.mxu0 %v1620
        %1771 = vmatpush.msra.mxu0 %v1619
        %1772 = vmatpush.msra.mxu0 %v1618
        %1773 = vmatpush.msra.mxu0 %v1617
        %1774 = vmatpush.msra.mxu0 %v1616
        %1775 = vmatpush.msra.mxu0 %v1615
        %1776 = vmatpush.msra.mxu0 %v1614
        %1777 = vmatpush.msra.mxu0 %v1613
        %1778 = vmatmul.f32.gmra.mxu0 %v1684
        %v1779 = vpop.f32.mrf.mxu0
        %v1780 = vadd.f32 %v1745, %v1779
        %1781 = vmatmul.f32.gmra.mxu0 %v1686
        %v1782 = vpop.f32.mrf.mxu0
        %v1783 = vadd.f32 %v1748, %v1782
        %1784 = vmatmul.f32.gmra.mxu0 %v1689
        %v1785 = vpop.f32.mrf.mxu0
        %v1786 = vadd.f32 %v1751, %v1785
        %1787 = vmatmul.f32.gmra.mxu0 %v1691
        %v1788 = vpop.f32.mrf.mxu0
        %v1789 = vadd.f32 %v1754, %v1788
        %1790 = vmatmul.f32.gmra.mxu0 %v1694
        %v1791 = vpop.f32.mrf.mxu0
        %v1792 = vadd.f32 %v1757, %v1791
        %1793 = vmatmul.f32.gmra.mxu0 %v1696
        %v1794 = vpop.f32.mrf.mxu0
        %v1795 = vadd.f32 %v1760, %v1794
        %1796 = vdwg.mxu0
        %1797 = vmatpush.msra.mxu0 %v1644
        %1798 = vmatpush.msra.mxu0 %v1643
        %1799 = vmatpush.msra.mxu0 %v1642
        %1800 = vmatpush.msra.mxu0 %v1641
        %1801 = vmatpush.msra.mxu0 %v1640
        %1802 = vmatpush.msra.mxu0 %v1639
        %1803 = vmatpush.msra.mxu0 %v1638
        %1804 = vmatpush.msra.mxu0 %v1637
        %1805 = vmatpush.msra.mxu0 %v1636
        %1806 = vmatpush.msra.mxu0 %v1635
        %1807 = vmatpush.msra.mxu0 %v1634
        %1808 = vmatpush.msra.mxu0 %v1633
        %1809 = vmatpush.msra.mxu0 %v1632
        %1810 = vmatpush.msra.mxu0 %v1631
        %1811 = vmatpush.msra.mxu0 %v1630
        %1812 = vmatpush.msra.mxu0 %v1629
        %1813 = vmatmul.f32.gmra.mxu0 %v1705
        %v1814 = vpop.f32.mrf.mxu0
        %v1815 = vadd.f32 %v1780, %v1814
        %1816 = vmatmul.f32.gmra.mxu0 %v1707
        %v1817 = vpop.f32.mrf.mxu0
        %v1818 = vadd.f32 %v1783, %v1817
        %1819 = vmatmul.f32.gmra.mxu0 %v1710
        %v1820 = vpop.f32.mrf.mxu0
        %v1821 = vadd.f32 %v1786, %v1820
        %1822 = vmatmul.f32.gmra.mxu0 %v1712
        %v1823 = vpop.f32.mrf.mxu0
        %v1824 = vadd.f32 %v1789, %v1823
        %1825 = vmatmul.f32.gmra.mxu0 %v1715
        %v1826 = vpop.f32.mrf.mxu0
        %v1827 = vadd.f32 %v1792, %v1826
        %1828 = vmatmul.f32.gmra.mxu0 %v1717
        %v1829 = vpop.f32.mrf.mxu0
        %v1830 = vadd.f32 %v1795, %v1829
        %1831 = vdwg.mxu0
        %v1832 = vmax.f32 %v1815, 0.0
        %v1833 = vmax.f32 %v1818, 0.0
        %v1834 = vmax.f32 %v1821, 0.0
        %v1835 = vmax.f32 %v1824, 0.0
        %v1836 = vmax.f32 %v1827, 0.0
        %v1837 = vmax.f32 %v1830, 0.0
        %v1838 = vld [vmem:[#allocation11] sm:$0xff]
        %v1839 = vld [vmem:[#allocation11 + $0x8] sm:$0xff]
        %v1840 = vld [vmem:[#allocation11 + $0x10] sm:$0xff]
        %v1841 = vld [vmem:[#allocation11 + $0x18] sm:$0xff]
        %v1842 = vld [vmem:[#allocation11 + $0x20] sm:$0xff]
        %v1843 = vld [vmem:[#allocation11 + $0x28] sm:$0xff]
        %v1844 = vld [vmem:[#allocation11 + $0x30] sm:$0xff]
        %v1845 = vld [vmem:[#allocation11 + $0x38] sm:$0xff]
        %v1846 = vld [vmem:[#allocation11 + $0x40] sm:$0xff]
        %v1847 = vld [vmem:[#allocation11 + $0x48] sm:$0xff]
        %v1848 = vld [vmem:[#allocation11 + $0x50] sm:$0xff]
        %v1849 = vld [vmem:[#allocation11 + $0x58] sm:$0xff]
        %v1850 = vld [vmem:[#allocation11 + $0x60] sm:$0xff]
        %v1851 = vld [vmem:[#allocation11 + $0x68] sm:$0xff]
        %v1852 = vld [vmem:[#allocation11 + $0x70] sm:$0xff]
        %v1853 = vld [vmem:[#allocation11 + $0x78] sm:$0xff]
        %v1854 = vld [vmem:[#allocation11 + $0x80] sm:$0xff]
        %v1855 = vld [vmem:[#allocation11 + $0x88] sm:$0xff]
        %v1856 = vld [vmem:[#allocation11 + $0x90] sm:$0xff]
        %v1857 = vld [vmem:[#allocation11 + $0x98] sm:$0xff]
        %v1858 = vld [vmem:[#allocation11 + $0xa0] sm:$0xff]
        %v1859 = vld [vmem:[#allocation11 + $0xa8] sm:$0xff]
        %v1860 = vld [vmem:[#allocation11 + $0xb0] sm:$0xff]
        %v1861 = vld [vmem:[#allocation11 + $0xb8] sm:$0xff]
        %v1862 = vld [vmem:[#allocation11 + $0xc0] sm:$0xff]
        %v1863 = vld [vmem:[#allocation11 + $0xc8] sm:$0xff]
        %v1864 = vld [vmem:[#allocation11 + $0xd0] sm:$0xff]
        %v1865 = vld [vmem:[#allocation11 + $0xd8] sm:$0xff]
        %v1866 = vld [vmem:[#allocation11 + $0xe0] sm:$0xff]
        %v1867 = vld [vmem:[#allocation11 + $0xe8] sm:$0xff]
        %v1868 = vld [vmem:[#allocation11 + $0xf0] sm:$0xff]
        %v1869 = vld [vmem:[#allocation11 + $0xf8] sm:$0xff]
        %v1870 = vld [vmem:[#allocation11 + $0x100] sm:$0xff]
        %v1871 = vld [vmem:[#allocation11 + $0x108] sm:$0xff]
        %v1872 = vld [vmem:[#allocation11 + $0x110] sm:$0xff]
        %v1873 = vld [vmem:[#allocation11 + $0x118] sm:$0xff]
        %v1874 = vld [vmem:[#allocation11 + $0x120] sm:$0xff]
        %v1875 = vld [vmem:[#allocation11 + $0x128] sm:$0xff]
        %v1876 = vld [vmem:[#allocation11 + $0x130] sm:$0xff]
        %v1877 = vld [vmem:[#allocation11 + $0x138] sm:$0xff]
        %v1878 = vld [vmem:[#allocation11 + $0x140] sm:$0xff]
        %v1879 = vld [vmem:[#allocation11 + $0x148] sm:$0xff]
        %v1880 = vld [vmem:[#allocation11 + $0x150] sm:$0xff]
        %v1881 = vld [vmem:[#allocation11 + $0x158] sm:$0xff]
        %v1882 = vld [vmem:[#allocation11 + $0x160] sm:$0xff]
        %v1883 = vld [vmem:[#allocation11 + $0x168] sm:$0xff]
        %v1884 = vld [vmem:[#allocation11 + $0x170] sm:$0xff]
        %v1885 = vld [vmem:[#allocation11 + $0x178] sm:$0xff]
        %v1886 = vld [vmem:[%s12] sm:$0x1]
        %v1893 = vrot.slane %v1832, 7
        %v1894 = vrot.slane %v1833, 7
        %v1895 = vsel %vm685, %v1893, %v1894
        %v1896 = vrot.slane %v1834, 7
        %v1897 = vrot.slane %v1835, 7
        %v1898 = vsel %vm685, %v1896, %v1897
        %v1899 = vrot.slane %v1836, 7
        %v1900 = vrot.slane %v1837, 7
        %v1901 = vsel %vm685, %v1899, %v1900
        %v1911 = vsel %vm685, 0.0, %v1893
        %v1912 = vsel %vm685, 0.0, %v1896
        %v1913 = vsel %vm685, 0.0, %v1899
        %v1914 = vsel %vm685, %v1894, 0.0
        %v1915 = vsel %vm685, %v1897, 0.0
        %v1916 = vsel %vm685, %v1900, 0.0
        %v1923 = vrot.slane %v1911, 1
        %v1924 = vrot.slane %v1895, 1
        %v1925 = vsel %vm716, %v1923, %v1924
        %v1926 = vrot.slane %v1914, 1
        %v1927 = vsel %vm716, %v1924, %v1926
        %v1928 = vrot.slane %v1912, 1
        %v1929 = vrot.slane %v1898, 1
        %v1930 = vsel %vm716, %v1928, %v1929
        %v1931 = vrot.slane %v1915, 1
        %v1932 = vsel %vm716, %v1929, %v1931
        %v1933 = vrot.slane %v1913, 1
        %v1934 = vrot.slane %v1901, 1
        %v1935 = vsel %vm716, %v1933, %v1934
        %v1936 = vrot.slane %v1916, 1
        %v1937 = vsel %vm716, %v1934, %v1936
        %v1944 = vrot.slane %v1911, 2
        %v1945 = vrot.slane %v1895, 2
        %v1946 = vsel %vm738, %v1944, %v1945
        %v1947 = vrot.slane %v1914, 2
        %v1948 = vsel %vm738, %v1945, %v1947
        %v1949 = vrot.slane %v1912, 2
        %v1950 = vrot.slane %v1898, 2
        %v1951 = vsel %vm738, %v1949, %v1950
        %v1952 = vrot.slane %v1915, 2
        %v1953 = vsel %vm738, %v1950, %v1952
        %v1954 = vrot.slane %v1913, 2
        %v1955 = vrot.slane %v1901, 2
        %v1956 = vsel %vm738, %v1954, %v1955
        %v1957 = vrot.slane %v1916, 2
        %v1958 = vsel %vm738, %v1955, %v1957
        %v1966 = vperm.slane %v1886, 0
        %1968 = vmatpush.msra.mxu0 %v1853
        %1969 = vmatpush.msra.mxu0 %v1852
        %1970 = vmatpush.msra.mxu0 %v1851
        %1971 = vmatpush.msra.mxu0 %v1850
        %1972 = vmatpush.msra.mxu0 %v1849
        %1973 = vmatpush.msra.mxu0 %v1848
        %1974 = vmatpush.msra.mxu0 %v1847
        %1975 = vmatpush.msra.mxu0 %v1846
        %1976 = vmatpush.msra.mxu0 %v1845
        %1977 = vmatpush.msra.mxu0 %v1844
        %1978 = vmatpush.msra.mxu0 %v1843
        %1979 = vmatpush.msra.mxu0 %v1842
        %1980 = vmatpush.msra.mxu0 %v1841
        %1981 = vmatpush.msra.mxu0 %v1840
        %1982 = vmatpush.msra.mxu0 %v1839
        %1983 = vmatpush.msra.mxu0 %v1838
        %1984 = vmatmul.f32.gmra.mxu0 %v1911
        %v1985 = vpop.f32.mrf.mxu0
        %v1986 = vadd.f32 %v1966, %v1985
        %1987 = vmatmul.f32.gmra.mxu0 %v1895
        %v1988 = vpop.f32.mrf.mxu0
        %v1989 = vadd.f32 %v1966, %v1988
        %1990 = vmatmul.f32.gmra.mxu0 %v1912
        %v1991 = vpop.f32.mrf.mxu0
        %v1992 = vadd.f32 %v1966, %v1991
        %1993 = vmatmul.f32.gmra.mxu0 %v1898
        %v1994 = vpop.f32.mrf.mxu0
        %v1995 = vadd.f32 %v1966, %v1994
        %1996 = vmatmul.f32.gmra.mxu0 %v1913
        %v1997 = vpop.f32.mrf.mxu0
        %v1998 = vadd.f32 %v1966, %v1997
        %1999 = vmatmul.f32.gmra.mxu0 %v1901
        %v2000 = vpop.f32.mrf.mxu0
        %v2001 = vadd.f32 %v1966, %v2000
        %2002 = vdwg.mxu0
        %2003 = vmatpush.msra.mxu0 %v1869
        %2004 = vmatpush.msra.mxu0 %v1868
        %2005 = vmatpush.msra.mxu0 %v1867
        %2006 = vmatpush.msra.mxu0 %v1866
        %2007 = vmatpush.msra.mxu0 %v1865
        %2008 = vmatpush.msra.mxu0 %v1864
        %2009 = vmatpush.msra.mxu0 %v1863
        %2010 = vmatpush.msra.mxu0 %v1862
        %2011 = vmatpush.msra.mxu0 %v1861
        %2012 = vmatpush.msra.mxu0 %v1860
        %2013 = vmatpush.msra.mxu0 %v1859
        %2014 = vmatpush.msra.mxu0 %v1858
        %2015 = vmatpush.msra.mxu0 %v1857
        %2016 = vmatpush.msra.mxu0 %v1856
        %2017 = vmatpush.msra.mxu0 %v1855
        %2018 = vmatpush.msra.mxu0 %v1854
        %2019 = vmatmul.f32.gmra.mxu0 %v1925
        %v2020 = vpop.f32.mrf.mxu0
        %v2021 = vadd.f32 %v1986, %v2020
        %2022 = vmatmul.f32.gmra.mxu0 %v1927
        %v2023 = vpop.f32.mrf.mxu0
        %v2024 = vadd.f32 %v1989, %v2023
        %2025 = vmatmul.f32.gmra.mxu0 %v1930
        %v2026 = vpop.f32.mrf.mxu0
        %v2027 = vadd.f32 %v1992, %v2026
        %2028 = vmatmul.f32.gmra.mxu0 %v1932
        %v2029 = vpop.f32.mrf.mxu0
        %v2030 = vadd.f32 %v1995, %v2029
        %2031 = vmatmul.f32.gmra.mxu0 %v1935
        %v2032 = vpop.f32.mrf.mxu0
        %v2033 = vadd.f32 %v1998, %v2032
        %2034 = vmatmul.f32.gmra.mxu0 %v1937
        %v2035 = vpop.f32.mrf.mxu0
        %v2036 = vadd.f32 %v2001, %v2035
        %2037 = vdwg.mxu0
        %2038 = vmatpush.msra.mxu0 %v1885
        %2039 = vmatpush.msra.mxu0 %v1884
        %2040 = vmatpush.msra.mxu0 %v1883
        %2041 = vmatpush.msra.mxu0 %v1882
        %2042 = vmatpush.msra.mxu0 %v1881
        %2043 = vmatpush.msra.mxu0 %v1880
        %2044 = vmatpush.msra.mxu0 %v1879
        %2045 = vmatpush.msra.mxu0 %v1878
        %2046 = vmatpush.msra.mxu0 %v1877
        %2047 = vmatpush.msra.mxu0 %v1876
        %2048 = vmatpush.msra.mxu0 %v1875
        %2049 = vmatpush.msra.mxu0 %v1874
        %2050 = vmatpush.msra.mxu0 %v1873
        %2051 = vmatpush.msra.mxu0 %v1872
        %2052 = vmatpush.msra.mxu0 %v1871
        %2053 = vmatpush.msra.mxu0 %v1870
        %2054 = vmatmul.f32.gmra.mxu0 %v1946
        %v2055 = vpop.f32.mrf.mxu0
        %v2056 = vadd.f32 %v2021, %v2055
        %2057 = vmatmul.f32.gmra.mxu0 %v1948
        %v2058 = vpop.f32.mrf.mxu0
        %v2059 = vadd.f32 %v2024, %v2058
        %2060 = vmatmul.f32.gmra.mxu0 %v1951
        %v2061 = vpop.f32.mrf.mxu0
        %v2062 = vadd.f32 %v2027, %v2061
        %2063 = vmatmul.f32.gmra.mxu0 %v1953
        %v2064 = vpop.f32.mrf.mxu0
        %v2065 = vadd.f32 %v2030, %v2064
        %2066 = vmatmul.f32.gmra.mxu0 %v1956
        %v2067 = vpop.f32.mrf.mxu0
        %v2068 = vadd.f32 %v2033, %v2067
        %2069 = vmatmul.f32.gmra.mxu0 %v1958
        %v2070 = vpop.f32.mrf.mxu0
        %v2071 = vadd.f32 %v2036, %v2070
        %2072 = vdwg.mxu0
        %v2073 = vmax.f32 %v2056, 0.0
        %v2074 = vmax.f32 %v2059, 0.0
        %v2075 = vmax.f32 %v2062, 0.0
        %v2076 = vmax.f32 %v2065, 0.0
        %v2077 = vmax.f32 %v2068, 0.0
        %v2078 = vmax.f32 %v2071, 0.0
        %v2079 = vadd.f32 %v2073, %v2074
        %v2080 = vadd.f32 %v2079, %v2075
        %v2081 = vadd.f32 %v2080, %v2076
        %v2082 = vadd.f32 %v2081, %v2077
        %v2083 = vadd.f32 %v2082, %v2078
        %v2084 = vrot.slane %v2083, 4
        %v2085 = vadd.f32 %v2083, %v2084
        %v2086 = vrot.slane %v2085, 2
        %v2087 = vadd.f32 %v2085, %v2086
        %v2088 = vrot.slane %v2087, 1
        %v2089 = vadd.f32 %v2087, %v2088
        %p2090 = scmp.eq.s32.totalorder %s35, 0
        // Predicated region
        $region105: #{convnet2d_forward.1} parent=79 // pred_check
          %p2091 = pneg %p2090
        $region106: #{convnet2d_forward.1} parent=79 // pred_check_branch
          %2093 = sbr.rel (%p2091) target = $region108
        $region107: #{convnet2d_forward.1} parent=79 // pred_region
          %2094 = vst [vmem:[#allocation2] sm:$0x1] 0.0
        $region108: #{convnet2d_forward.1} parent=79 // pred_fallthru
          _
        %v2095 = vld [vmem:[#allocation2] sm:$0x1]
        %v2096 = vadd.f32 %v2095, %v2089
        %2097 = vst [vmem:[#allocation2] sm:$0x1] %v2096
        // Predicated region
        $region109: #{convnet2d_forward.1} parent=79 // pred_check
          %p2098 = pneg %p2090
        $region110: #{convnet2d_forward.1} parent=79 // pred_check_branch
          %2100 = sbr.rel (%p2098) target = $region112
        $region111: #{convnet2d_forward.1} parent=79 // pred_region
          %v2101 = vld [vmem:[#allocation2] sm:$0x1]
          %v2102 = vmul.f32 %v2101, 0.020833334
          %v2103 = vld [vmem:[%s13] sm:$0xff]
          %v2104 = vld [vmem:[%s13 + $0x8] sm:$0xff]
          %v2105 = vld [vmem:[%s13 + $0x10] sm:$0xff]
          %v2106 = vld [vmem:[%s13 + $0x18] sm:$0xff]
          %v2107 = vld [vmem:[%s13 + $0x20] sm:$0xff]
          %v2108 = vld [vmem:[%s13 + $0x28] sm:$0xff]
          %v2109 = vld [vmem:[%s13 + $0x30] sm:$0xff]
          %v2110 = vld [vmem:[%s13 + $0x38] sm:$0xff]
          %v2111 = vld [vmem:[%s13 + $0x40] sm:$0xff]
          %v2112 = vld [vmem:[%s13 + $0x48] sm:$0xff]
          %v2113 = vld [vmem:[%s13 + $0x50] sm:$0xff]
          %v2114 = vld [vmem:[%s13 + $0x58] sm:$0xff]
          %v2115 = vld [vmem:[%s13 + $0x60] sm:$0xff]
          %v2116 = vld [vmem:[%s13 + $0x68] sm:$0xff]
          %v2117 = vld [vmem:[%s13 + $0x70] sm:$0xff]
          %v2118 = vld [vmem:[%s13 + $0x78] sm:$0xff]
          %v2119 = vld [vmem:[%s14] sm:$0x1]
          %2120 = vmatpush.msra.mxu0 %v2118
          %2121 = vmatpush.msra.mxu0 %v2117
          %2122 = vmatpush.msra.mxu0 %v2116
          %2123 = vmatpush.msra.mxu0 %v2115
          %2124 = vmatpush.msra.mxu0 %v2114
          %2125 = vmatpush.msra.mxu0 %v2113
          %2126 = vmatpush.msra.mxu0 %v2112
          %2127 = vmatpush.msra.mxu0 %v2111
          %2128 = vmatpush.msra.mxu0 %v2110
          %2129 = vmatpush.msra.mxu0 %v2109
          %2130 = vmatpush.msra.mxu0 %v2108
          %2131 = vmatpush.msra.mxu0 %v2107
          %2132 = vmatpush.msra.mxu0 %v2106
          %2133 = vmatpush.msra.mxu0 %v2105
          %2134 = vmatpush.msra.mxu0 %v2104
          %2135 = vmatpush.msra.mxu0 %v2103
          %2136 = vmatmul.f32.gmra.mxu0 %v2102
          %v2137 = vpop.f32.mrf.mxu0
          %v2138 = vadd.f32 %v2119, %v2137
          %2139 = vdwg.mxu0
          %v2140 = vperm.slane %v2138, 0
          %2141 = vst [vmem:[%s623] sm:$0xff] %v2140
        $region112: #{convnet2d_forward.1} parent=79 // pred_fallthru
          _
        %p2142 = scmp.lt.s32.totalorder %s34, 1
        %s2143 = scalar_select %p2142, %s34, 1
        %s2144 = smul.addr %s2143, 8
        %s2145 = scalar_lea.vmem %s15, %s2144
        // Predicated region
        $region113: #{convnet2d_forward.1} parent=79 // pred_check
          %p2146 = pneg %p382
        $region114: #{convnet2d_forward.1} parent=79 // pred_check_branch
          %2148 = sbr.rel (%p2146) target = $region116
        $region115: #{convnet2d_forward.1} parent=79 // pred_region
          _
        $region116: #{convnet2d_forward.1} parent=79 // pred_fallthru
          _
      $region80: #{convnet2d_forward.1} parent=5 // pred_fallthru
        _
      %p2149 = scmp.le.s32.totalorder 2, %s25
      // Predicated region
      $region117: #{convnet2d_forward.1} parent=5 // pred_check
        %p2150 = pneg %p2149
      $region118: #{convnet2d_forward.1} parent=5 // pred_check_branch
        %2152 = sbr.rel (%p2150) target = $region120
      $region119: #{convnet2d_forward.1} parent=5 // pred_region
        %s2153 = ssub.s32 %s25, 2
        // Predicated region
        $region121: #{convnet2d_forward.1} parent=119 // pred_check
          %p2154 = pneg %p388
        $region122: #{convnet2d_forward.1} parent=119 // pred_check_branch
          %2156 = sbr.rel (%p2154) target = $region124
        $region123: #{convnet2d_forward.1} parent=119 // pred_region
          %p2157 = scmp.lt.s32.totalorder %s36, 1
          %s2158 = scalar_select %p2157, %s36, 1
          %s2159 = smul.addr %s2158, 8
          %s2160 = scalar_lea.vmem %s15, %s2159
        $region124: #{convnet2d_forward.1} parent=119 // pred_fallthru
          _
      $region120: #{convnet2d_forward.1} parent=5 // pred_fallthru
        _
    $region6: #{convnet2d_forward.1} parent=1 // loop_footer
      %s29 = sadd.s32 1, %s25
    $region7: #{convnet2d_forward.1} parent=1 // loop_footer_branch
      %24 = sbr.rel target = $region3
    $region8: #{convnet2d_forward.1} parent=1 // loop_exit
      _
    %2161 = vsyncpa [#allocation4], 1
    %s2162 = scalar_lea.sflag [#allocation4], 1
    %2163 = vsyncpa %s2162, 1
    %2164 = vsyncpa [#allocation6], 1
    %2165 = vsyncpa [#allocation9], 1
    %2166 = vsyncpa [#allocation12], 1

</llo_original>
